<compile_context>
chip_gen: v6e
topology: v6e:2x2x1
jax: 0.10.0
libtpu: 0.0.40
codegen_flags: <defaults>
</compile_context>

<pallas_src>
import functools

import jax
import jax.numpy as jnp
from jax.experimental import pallas as pl
from jax.experimental.pallas import tpu as pltpu


def tcr2profile_kernel(x_ref, eps_ref, w1_ref, b1_ref, wh_ref, bh_ref,
                       sample_ref, kl_ref, *, out_dim, block_rows, total_rows):
    # layer1 + ReLU
    x = x_ref[...]
    h = jnp.dot(x, w1_ref[...], preferred_element_type=jnp.float32) + b1_ref[...]
    h = jnp.maximum(h, 0.0)

    # fused mean / log-var heads: one wide matmul instead of two narrow ones
    heads = jnp.dot(h, wh_ref[...], preferred_element_type=jnp.float32) + bh_ref[...]
    mu = heads[:, :out_dim]
    log_var = heads[:, out_dim:]

    # reparameterization: sample = mu + eps * exp(0.5 * log_var)
    std = jnp.exp(0.5 * log_var)
    sample_ref[...] = (mu + eps_ref[...] * std).astype(sample_ref.dtype)

    # KL partial sum for this block.  exp(log_var) == std * std (reuses the EUP result,
    # saving one transcendental per element).
    per_row = -0.001 * jnp.sum(1.0 + log_var - mu * mu - std * std,
                               axis=1, keepdims=True)                      # (TB, 1)
    # mask rows that are only batch padding (B was rounded up to a multiple of block_rows)
    row_ids = (jax.lax.broadcasted_iota(jnp.int32, (block_rows, 1), 0)
               + pl.program_id(0) * block_rows)
    per_row = jnp.where(row_ids < total_rows, per_row, 0.0)
    partial = jnp.sum(per_row)                                             # scalar
    # write the scalar into a lane/sublane-dense (1, 8, 128) slab; wrapper reads [i, 0, 0]
    kl_ref[...] = jnp.broadcast_to(partial.reshape(1, 1, 1), kl_ref.shape)


def tcr2profile_forward(x, params, eps, *, block_rows=128):
    """x: (B, in_dim) f32; params: dict of pre-transposed weights; eps: (B, out_dim) f32.
    Returns (sample (B, out_dim), kl scalar) matching the PyTorch forward."""
    B, in_dim = x.shape
    out_dim = params["w1"].shape[1]

    # sublane-aligned batch tile; small batches collapse to a single block
    tb = min(block_rows, max(8, ((B + 7) // 8) * 8))
    num_blocks = pl.cdiv(B, tb)
    b_pad = num_blocks * tb
    if b_pad != B:
        x = jnp.pad(x, ((0, b_pad - B), (0, 0)))
        eps = jnp.pad(eps, ((0, b_pad - B), (0, 0)))

    # fuse the two head projections into one wide matmul (split stays 128-aligned for
    # the default out_dim=256)
    w_heads = jnp.concatenate([params["wm"], params["ws"]], axis=1)   # (out_dim, 2*out_dim)
    b_heads = jnp.concatenate([params["bm"], params["bs"]], axis=1)   # (1, 2*out_dim)

    kernel = functools.partial(tcr2profile_kernel, out_dim=out_dim,
                               block_rows=tb, total_rows=B)

    sample_pad, kl_partial = pl.pallas_call(
        kernel,
        out_shape=(
            jax.ShapeDtypeStruct((b_pad, out_dim), jnp.float32),
            jax.ShapeDtypeStruct((num_blocks, 8, 128), jnp.float32),
        ),
        grid_spec=pltpu.PrefetchScalarGridSpec(
            num_scalar_prefetch=0,
            grid=(num_blocks,),
            in_specs=[
                pl.BlockSpec((tb, in_dim), lambda i: (i, 0)),            # x tile (pipelined)
                pl.BlockSpec((tb, out_dim), lambda i: (i, 0)),           # eps tile (pipelined)
                pl.BlockSpec((in_dim, out_dim), lambda i: (0, 0)),       # w1 (VMEM-resident)
                pl.BlockSpec((1, out_dim), lambda i: (0, 0)),            # b1 (VMEM-resident)
                pl.BlockSpec((out_dim, 2 * out_dim), lambda i: (0, 0)),  # fused head weights
                pl.BlockSpec((1, 2 * out_dim), lambda i: (0, 0)),        # fused head biases
            ],
            out_specs=(
                pl.BlockSpec((tb, out_dim), lambda i: (i, 0)),           # sample tile
                pl.BlockSpec((1, 8, 128), lambda i: (i, 0, 0)),          # per-block KL partial
            ),
        ),
        compiler_params=pltpu.CompilerParams(
            dimension_semantics=("parallel",)),                          # megacore-shardable
    )(x, eps, params["w1"], params["b1"], w_heads, b_heads)

    sample = sample_pad[:B]
    kl = jnp.sum(kl_partial[:, 0, 0]) / B                                # global mean in wrapper
    return sample, kl


def init_params(key, in_dim, out_dim):
    """Deterministic synthetic parameters (weights stored as (in_dim, out_dim))."""
    ks = jax.random.split(key, 6)
    scale1 = 1.0 / jnp.sqrt(in_dim)
    scale2 = 1.0 / jnp.sqrt(out_dim)
    return {
        "w1": jax.random.uniform(ks[0], (in_dim, out_dim), jnp.float32, -scale1, scale1),
        "b1": jax.random.uniform(ks[1], (1, out_dim), jnp.float32, -scale1, scale1),
        "wm": jax.random.uniform(ks[2], (out_dim, out_dim), jnp.float32, -scale2, scale2),
        "bm": jax.random.uniform(ks[3], (1, out_dim), jnp.float32, -scale2, scale2),
        "ws": jax.random.uniform(ks[4], (out_dim, out_dim), jnp.float32, -scale2, scale2),
        "bs": jax.random.uniform(ks[5], (1, out_dim), jnp.float32, -scale2, scale2),
    }


def reference_forward(x, params, eps):
    h = jnp.maximum(x @ params["w1"] + params["b1"], 0.0)
    mu = h @ params["wm"] + params["bm"]
    log_var = h @ params["ws"] + params["bs"]
    sample = mu + eps * jnp.exp(0.5 * log_var)
    kl = jnp.mean(-0.001 * jnp.sum(1 + log_var - mu**2 - jnp.exp(log_var), axis=1), axis=0)
    return sample, kl


if __name__ == "__main__":
    # module-default feature dims (256, lane-aligned); B exercises padding + a 2-step grid
    B, in_dim, out_dim = 200, 256, 256
    key = jax.random.PRNGKey(0)
    k_x, k_eps, k_p = jax.random.split(key, 3)

    x = jax.random.normal(k_x, (B, in_dim), jnp.float32)
    # torch.randn_like(std) replaced by a deterministic Gaussian passed into the kernel.
    eps = jax.random.normal(k_eps, (B, out_dim), jnp.float32)
    params = init_params(k_p, in_dim, out_dim)

    sample, kl = tcr2profile_forward(x, params, eps)
    jax.block_until_ready((sample, kl))

    ref_sample, ref_kl = reference_forward(x, params, eps)
    assert sample.shape == (B, out_dim)
    assert jnp.allclose(sample, ref_sample, atol=1e-3, rtol=1e-3), \
        float(jnp.max(jnp.abs(sample - ref_sample)))
    assert jnp.allclose(kl, ref_kl, atol=1e-4, rtol=1e-3), (float(kl), float(ref_kl))
    print("KERNEL_OK")
</pallas_src>

<mosaic_0001>
module attributes {stable_mosaic.version = 11 : i64} {
  func.func @tcr2profile_kernel(%arg0: i32, %arg1: memref<128x256xf32, #tpu.memory_space<vmem>>, %arg2: memref<128x256xf32, #tpu.memory_space<vmem>>, %arg3: memref<256x256xf32, #tpu.memory_space<vmem>>, %arg4: memref<1x256xf32, #tpu.memory_space<vmem>>, %arg5: memref<256x512xf32, #tpu.memory_space<vmem>>, %arg6: memref<1x512xf32, #tpu.memory_space<vmem>>, %arg7: memref<128x256xf32, #tpu.memory_space<vmem>>, %arg8: memref<1x8x128xf32, #tpu.memory_space<vmem>>) attributes {dimension_semantics = [#tpu.dimension_semantics<parallel>], iteration_bounds = array<i64: 2>, scalar_prefetch = 0 : i64, scratch_operands = 0 : i64, tpu.core_type = #tpu.core_type<tc>, window_params = [{transform_indices = @transform_0, window_bounds = array<i64: 128, 256>}, {transform_indices = @transform_1, window_bounds = array<i64: 128, 256>}, {pipeline_mode = #tpu.pipeline_mode<synchronous>, transform_indices = @transform_2, window_bounds = array<i64: 256, 256>}, {pipeline_mode = #tpu.pipeline_mode<synchronous>, transform_indices = @transform_3, window_bounds = array<i64: 1, 256>}, {pipeline_mode = #tpu.pipeline_mode<synchronous>, transform_indices = @transform_4, window_bounds = array<i64: 256, 512>}, {pipeline_mode = #tpu.pipeline_mode<synchronous>, transform_indices = @transform_5, window_bounds = array<i64: 1, 512>}, {transform_indices = @transform_6, window_bounds = array<i64: 128, 256>}, {transform_indices = @transform_7, window_bounds = array<i64: 1, 8, 128>}]} {
    %c0 = arith.constant 0 : index
    %c0_0 = arith.constant 0 : index
    %0 = vector.load %arg1[%c0, %c0_0] : memref<128x256xf32, #tpu.memory_space<vmem>>, vector<128x256xf32>
    %c0_1 = arith.constant 0 : index
    %c0_2 = arith.constant 0 : index
    %1 = vector.load %arg3[%c0_1, %c0_2] : memref<256x256xf32, #tpu.memory_space<vmem>>, vector<256x256xf32>
    %cst = arith.constant dense<0.000000e+00> : vector<128x256xf32>
    %2 = tpu.matmul %0, %1, %cst {dimension_numbers = #tpu.dot_dimension_numbers<[1], [0], [0], [1], [0, 0, 1, 1], [], []>} : vector<128x256xf32>, vector<256x256xf32>, vector<128x256xf32> -> vector<128x256xf32>
    %c0_3 = arith.constant 0 : index
    %c0_4 = arith.constant 0 : index
    %3 = vector.load %arg4[%c0_3, %c0_4] : memref<1x256xf32, #tpu.memory_space<vmem>>, vector<1x256xf32>
    %4 = vector.broadcast %3 : vector<1x256xf32> to vector<128x256xf32>
    %5 = arith.addf %2, %4 : vector<128x256xf32>
    %cst_5 = arith.constant 0.000000e+00 : f32
    %6 = vector.broadcast %cst_5 : f32 to vector<128x256xf32>
    %7 = arith.maximumf %5, %6 : vector<128x256xf32>
    %c0_6 = arith.constant 0 : index
    %c0_7 = arith.constant 0 : index
    %8 = vector.load %arg5[%c0_6, %c0_7] : memref<256x512xf32, #tpu.memory_space<vmem>>, vector<256x512xf32>
    %cst_8 = arith.constant dense<0.000000e+00> : vector<128x512xf32>
    %9 = tpu.matmul %7, %8, %cst_8 {dimension_numbers = #tpu.dot_dimension_numbers<[1], [0], [0], [1], [0, 0, 1, 1], [], []>} : vector<128x256xf32>, vector<256x512xf32>, vector<128x512xf32> -> vector<128x512xf32>
    %c0_9 = arith.constant 0 : index
    %c0_10 = arith.constant 0 : index
    %10 = vector.load %arg6[%c0_9, %c0_10] : memref<1x512xf32, #tpu.memory_space<vmem>>, vector<1x512xf32>
    %11 = vector.broadcast %10 : vector<1x512xf32> to vector<128x512xf32>
    %12 = arith.addf %9, %11 : vector<128x512xf32>
    %13 = vector.extract_strided_slice %12 {offsets = [0, 0], sizes = [128, 256], strides = [1, 1]} : vector<128x512xf32> to vector<128x256xf32>
    %14 = vector.extract_strided_slice %12 {offsets = [0, 256], sizes = [128, 256], strides = [1, 1]} : vector<128x512xf32> to vector<128x256xf32>
    %cst_11 = arith.constant 5.000000e-01 : f32
    %15 = vector.broadcast %cst_11 : f32 to vector<128x256xf32>
    %16 = arith.mulf %15, %14 : vector<128x256xf32>
    %17 = math.exp %16 : vector<128x256xf32>
    %c0_12 = arith.constant 0 : index
    %c0_13 = arith.constant 0 : index
    %18 = vector.load %arg2[%c0_12, %c0_13] : memref<128x256xf32, #tpu.memory_space<vmem>>, vector<128x256xf32>
    %19 = arith.mulf %18, %17 : vector<128x256xf32>
    %20 = arith.addf %13, %19 : vector<128x256xf32>
    %c0_14 = arith.constant 0 : index
    %c0_15 = arith.constant 0 : index
    %21 = vector.load %arg7[%c0_14, %c0_15] : memref<128x256xf32, #tpu.memory_space<vmem>>, vector<128x256xf32>
    tpu.vector_store %arg7[%c0_14, %c0_15], %20 {strides = array<i32>} : memref<128x256xf32, #tpu.memory_space<vmem>>, vector<128x256xf32>,
    %cst_16 = arith.constant 1.000000e+00 : f32
    %22 = vector.broadcast %cst_16 : f32 to vector<128x256xf32>
    %23 = arith.addf %22, %14 : vector<128x256xf32>
    %24 = arith.mulf %13, %13 : vector<128x256xf32>
    %25 = arith.subf %23, %24 : vector<128x256xf32>
    %26 = arith.mulf %17, %17 : vector<128x256xf32>
    %27 = arith.subf %25, %26 : vector<128x256xf32>
    %cst_17 = arith.constant dense<0.000000e+00> : vector<128xf32>
    %28 = vector.multi_reduction <add>, %27, %cst_17 [1] : vector<128x256xf32> to vector<128xf32>
    %29 = vector.shape_cast %28 : vector<128xf32> to vector<128x1xf32>
    %cst_18 = arith.constant -1.000000e-03 : f32
    %30 = vector.broadcast %cst_18 : f32 to vector<128x1xf32>
    %31 = arith.mulf %30, %29 : vector<128x1xf32>
    %32 = tpu.iota {dimensions = array<i32: 0>} : vector<128x1xi32>
    %c128_i32 = arith.constant 128 : i32
    %33 = arith.muli %arg0, %c128_i32 : i32
    %34 = vector.broadcast %33 : i32 to vector<128x1xi32>
    %35 = arith.addi %32, %34 : vector<128x1xi32>
    %c200_i32 = arith.constant 200 : i32
    %36 = vector.broadcast %c200_i32 : i32 to vector<128x1xi32>
    %37 = arith.cmpi slt, %35, %36 : vector<128x1xi32>
    %cst_19 = arith.constant 0.000000e+00 : f32
    %38 = vector.broadcast %cst_19 : f32 to vector<128x1xf32>
    %39 = arith.select %37, %31, %38 : vector<128x1xi1>, vector<128x1xf32>
    %40 = vector.shape_cast %39 : vector<128x1xf32> to vector<1x128x1xf32>
    %cst_20 = arith.constant dense<0.000000e+00> : vector<1xf32>
    %41 = vector.multi_reduction <add>, %40, %cst_20 [1, 2] : vector<1x128x1xf32> to vector<1xf32>
    %42 = vector.shape_cast %41 : vector<1xf32> to vector<1x1x1xf32>
    %43 = vector.extract %42[0, 0, 0] : f32 from vector<1x1x1xf32>
    %44 = vector.broadcast %43 : f32 to vector<1x1x1xf32>
    %45 = vector.shape_cast %44 : vector<1x1x1xf32> to vector<1x1x1xf32>
    %46 = vector.broadcast %45 : vector<1x1x1xf32> to vector<1x8x128xf32>
    %c0_21 = arith.constant 0 : index
    %c0_22 = arith.constant 0 : index
    %c0_23 = arith.constant 0 : index
    %47 = vector.load %arg8[%c0_21, %c0_22, %c0_23] : memref<1x8x128xf32, #tpu.memory_space<vmem>>, vector<1x8x128xf32>
    tpu.vector_store %arg8[%c0_21, %c0_22, %c0_23], %46 {strides = array<i32>} : memref<1x8x128xf32, #tpu.memory_space<vmem>>, vector<1x8x128xf32>,
    return
  }
  func.func @transform_0(%arg0: i32) -> (i32, i32) {
    %c0_i32 = arith.constant 0 : i32
    %c0_i32_0 = arith.constant 0 : i32
    return %arg0, %c0_i32 : i32, i32
  }
  func.func @transform_1(%arg0: i32) -> (i32, i32) {
    %c0_i32 = arith.constant 0 : i32
    %c0_i32_0 = arith.constant 0 : i32
    return %arg0, %c0_i32 : i32, i32
  }
  func.func @transform_2(%arg0: i32) -> (i32, i32) {
    %c0_i32 = arith.constant 0 : i32
    %c0_i32_0 = arith.constant 0 : i32
    %c0_i32_1 = arith.constant 0 : i32
    return %c0_i32, %c0_i32_0 : i32, i32
  }
  func.func @transform_3(%arg0: i32) -> (i32, i32) {
    %c0_i32 = arith.constant 0 : i32
    %c0_i32_0 = arith.constant 0 : i32
    %c0_i32_1 = arith.constant 0 : i32
    return %c0_i32, %c0_i32_0 : i32, i32
  }
  func.func @transform_4(%arg0: i32) -> (i32, i32) {
    %c0_i32 = arith.constant 0 : i32
    %c0_i32_0 = arith.constant 0 : i32
    %c0_i32_1 = arith.constant 0 : i32
    return %c0_i32, %c0_i32_0 : i32, i32
  }
  func.func @transform_5(%arg0: i32) -> (i32, i32) {
    %c0_i32 = arith.constant 0 : i32
    %c0_i32_0 = arith.constant 0 : i32
    %c0_i32_1 = arith.constant 0 : i32
    return %c0_i32, %c0_i32_0 : i32, i32
  }
  func.func @transform_6(%arg0: i32) -> (i32, i32) {
    %c0_i32 = arith.constant 0 : i32
    %c0_i32_0 = arith.constant 0 : i32
    return %arg0, %c0_i32 : i32, i32
  }
  func.func @transform_7(%arg0: i32) -> (i32, i32, i32) {
    %c0_i32 = arith.constant 0 : i32
    %c0_i32_0 = arith.constant 0 : i32
    %c0_i32_1 = arith.constant 0 : i32
    return %arg0, %c0_i32, %c0_i32_0 : i32, i32, i32
  }
}

</mosaic_0001>

<llo_original>
// kernel: tpu_custom_call.1
$region0: #{tpu_custom_call.1}
  #allocation0 [shape = 'u32[]', space=smem, size = 0x4, offset = 0x4, fixed_abs, tag = 'smem constant byte address 0x4 - core index']
  #allocation1 [shape = 'u32[144,128]{1,0:T(1,128)}', space=vmem, size = 0x12000, scoped, tag = 'internal scratch']
  %s0 = inlined_call_operand.hbm [shape: f32[256,256], index: 0, kind: input, shape index: {}]
  %s1 = inlined_call_operand.hbm [shape: f32[256,256], index: 1, kind: input, shape index: {}]
  %s2 = inlined_call_operand.hbm [shape: f32[256,256], index: 2, kind: input, shape index: {}]
  %s3 = inlined_call_operand.vmem [shape: f32[1,256], index: 3, kind: input, shape index: {}]
  %s4 = inlined_call_operand.hbm [shape: f32[256,512], index: 4, kind: input, shape index: {}]
  %s5 = inlined_call_operand.vmem [shape: f32[1,512], index: 5, kind: input, shape index: {}]
  %s6 = inlined_call_operand.hbm [shape: f32[256,256], index: 6, kind: output, shape index: {0}]
  %s7 = inlined_call_operand.hbm [shape: f32[2,8,128], index: 7, kind: output, shape index: {1}]
  %8 = xla_tuple %s6, %s7
  %s9 = sld [smem:[#allocation0]]
  $region81: #{tpu_custom_call.1} parent=0
    _
  %s11 = ssub.s32 1, %s9
  %s12 = scalar_select 0, %s11, %s9
  $region1: #{tpu_custom_call.1} parent=0
    #allocation2 [shape = 'u8[262144]{0}', space=vmem, size = 0x40000, scoped, tag = 'input window, operand 0']
    #allocation3 [shape = 's32[2]{0}', space=sflag, size = 0x8, scoped, tag = 'scoped memory for tpu_custom_call.1']
    #allocation4 [shape = 's32[2]{0}', space=sflag, size = 0x8, scoped, tag = 'scoped memory for tpu_custom_call.1']
    #allocation5 [shape = 'u8[262144]{0}', space=vmem, size = 0x40000, scoped, tag = 'input window, operand 1']
    #allocation6 [shape = 's32[2]{0}', space=sflag, size = 0x8, scoped, tag = 'scoped memory for tpu_custom_call.1']
    #allocation7 [shape = 'u8[262144]{0}', space=vmem, size = 0x40000, scoped, tag = 'input window, operand 2, single buffered']
    #allocation8 [shape = 'u8[524288]{0}', space=vmem, size = 0x80000, scoped, tag = 'input window, operand 4, single buffered']
    #allocation9 [shape = 's32[1]{0}', space=sflag, size = 0x4, scoped, tag = 'scoped memory for tpu_custom_call.1']
    #allocation10 [shape = 'u8[262144]{0}', space=vmem, size = 0x40000, scoped, tag = 'output window, operand 0']
    #allocation11 [shape = 'u8[8192]{0}', space=vmem, size = 0x2000, scoped, tag = 'output window, operand 1']
    #allocation12 [shape = 's32[2]{0}', space=sflag, size = 0x8, scoped, tag = 'scoped memory for tpu_custom_call.1']
    %13 = vsyncpa [#allocation3], 0
    %s14 = scalar_lea.sflag [#allocation3], 1
    %15 = vsyncpa %s14, 0
    %16 = vsyncpa [#allocation6], 0
    %s17 = scalar_lea.sflag [#allocation6], 1
    %18 = vsyncpa %s17, 0
    %19 = vsyncpa [#allocation9], 0
    %20 = vsyncpa [#allocation4], 0
    %s21 = scalar_lea.sflag [#allocation4], 1
    %22 = vsyncpa %s21, 0
    %23 = vsyncpa [#allocation12], 0
    %s24 = scalar_lea.sflag [#allocation12], 1
    %25 = vsyncpa %s24, 0
    loop: start=0, step=1, limit=4
    $region2: #{tpu_custom_call.1} parent=1 // loop_pre_header
      _
    $region3: #{tpu_custom_call.1} parent=1 // loop_header
      %s27 = sphi 0, %s31
      %p28 = scmp.ge.s32.totalorder %s27, 4
      %s37 = sphi 0, %s39
      %s40 = sphi 0, %s37
      %s41 = sphi 0, %s40
      %s57 = sphi 0, %s41
      %s63 = sphi 0, %s65
      %s66 = sphi 0, %s63
      %s67 = sphi 0, %s66
      %s83 = sphi 0, %s67
      %s87 = sphi 0, %s87
      %s89 = sphi 0, %s87
      %s90 = sphi 0, %s89
      %s104 = sphi 0, %s90
      %s108 = sphi 0, %s108
      %s110 = sphi 0, %s108
      %s111 = sphi 0, %s110
      %s125 = sphi 0, %s111
      %s129 = sphi 0, %s129
      %s131 = sphi 0, %s129
      %s132 = sphi 0, %s131
      %s146 = sphi 0, %s132
      %s150 = sphi 0, %s150
      %s152 = sphi 0, %s150
      %s153 = sphi 0, %s152
      %s167 = sphi 0, %s153
      %s173 = sphi 0, %s175
      %s176 = sphi 0, %s173
      %s177 = sphi 0, %s176
      %s193 = sphi 0, %s177
      %s199 = sphi 0, %s201
      %s202 = sphi 0, %s199
      %s203 = sphi 0, %s202
      %s219 = sphi 0, %s203
    $region4: #{tpu_custom_call.1} parent=1 // loop_header_branch
      %30 = sbr.rel (%p28) target = $region8
    $region5: #{tpu_custom_call.1} parent=1 // loop_body
      %s32 = ssub.s32 %s27, 1
      %s33 = ssub.s32 %s27, 2
      %s34 = sadd.s32 %s27, 1
      %s35 = ssub.s32 %s27, %s34
      %p36 = scmp.eq.s32.totalorder %s35, 0
      %s38 = sadd.s32 %s37, 1
      %s39 = scalar_select %p36, %s37, %s38
      %p42 = pneg %p36
      %p43 = scmp.eq.s32.totalorder %s27, 1
      %p44 = por %p42, %p43
      %p45 = scmp.ne.s32.totalorder %s37, %s40
      %p46 = scmp.eq.s32.totalorder %s27, 0
      %p47 = por %p45, %p46
      %p48 = scmp.ne.s32.totalorder %s37, %s40
      %p49 = scmp.eq.s32.totalorder %s32, 1
      %p50 = por %p48, %p49
      %p51 = scmp.ne.s32.totalorder %s40, %s41
      %p52 = scmp.eq.s32.totalorder %s32, 0
      %p53 = por %p51, %p52
      %p54 = scmp.ne.s32.totalorder %s40, %s41
      %p55 = scmp.eq.s32.totalorder %s33, 1
      %p56 = por %p54, %p55
      %p58 = scmp.ne.s32.totalorder %s41, %s57
      %p59 = scmp.eq.s32.totalorder %s33, 0
      %p60 = por %p58, %p59
      %s61 = ssub.s32 %s27, %s34
      %p62 = scmp.eq.s32.totalorder %s61, 0
      %s64 = sadd.s32 %s63, 1
      %s65 = scalar_select %p62, %s63, %s64
      %p68 = pneg %p62
      %p69 = scmp.eq.s32.totalorder %s27, 1
      %p70 = por %p68, %p69
      %p71 = scmp.ne.s32.totalorder %s63, %s66
      %p72 = scmp.eq.s32.totalorder %s27, 0
      %p73 = por %p71, %p72
      %p74 = scmp.ne.s32.totalorder %s63, %s66
      %p75 = scmp.eq.s32.totalorder %s32, 1
      %p76 = por %p74, %p75
      %p77 = scmp.ne.s32.totalorder %s66, %s67
      %p78 = scmp.eq.s32.totalorder %s32, 0
      %p79 = por %p77, %p78
      %p80 = scmp.ne.s32.totalorder %s66, %s67
      %p81 = scmp.eq.s32.totalorder %s33, 1
      %p82 = por %p80, %p81
      %p84 = scmp.ne.s32.totalorder %s67, %s83
      %p85 = scmp.eq.s32.totalorder %s33, 0
      %p86 = por %p84, %p85
      %s88 = sadd.s32 %s87, 1
      %p91 = scmp.eq.s32.totalorder %s27, 1
      %p92 = scmp.ne.s32.totalorder %s87, %s89
      %p93 = scmp.eq.s32.totalorder %s27, 0
      %p94 = por %p92, %p93
      %p95 = scmp.ne.s32.totalorder %s87, %s89
      %p96 = scmp.eq.s32.totalorder %s32, 1
      %p97 = por %p95, %p96
      %p98 = scmp.ne.s32.totalorder %s89, %s90
      %p99 = scmp.eq.s32.totalorder %s32, 0
      %p100 = por %p98, %p99
      %p101 = scmp.ne.s32.totalorder %s89, %s90
      %p102 = scmp.eq.s32.totalorder %s33, 1
      %p103 = por %p101, %p102
      %p105 = scmp.ne.s32.totalorder %s90, %s104
      %p106 = scmp.eq.s32.totalorder %s33, 0
      %p107 = por %p105, %p106
      %s109 = sadd.s32 %s108, 1
      %p112 = scmp.eq.s32.totalorder %s27, 1
      %p113 = scmp.ne.s32.totalorder %s108, %s110
      %p114 = scmp.eq.s32.totalorder %s27, 0
      %p115 = por %p113, %p114
      %p116 = scmp.ne.s32.totalorder %s108, %s110
      %p117 = scmp.eq.s32.totalorder %s32, 1
      %p118 = por %p116, %p117
      %p119 = scmp.ne.s32.totalorder %s110, %s111
      %p120 = scmp.eq.s32.totalorder %s32, 0
      %p121 = por %p119, %p120
      %p122 = scmp.ne.s32.totalorder %s110, %s111
      %p123 = scmp.eq.s32.totalorder %s33, 1
      %p124 = por %p122, %p123
      %p126 = scmp.ne.s32.totalorder %s111, %s125
      %p127 = scmp.eq.s32.totalorder %s33, 0
      %p128 = por %p126, %p127
      %s130 = sadd.s32 %s129, 1
      %p133 = scmp.eq.s32.totalorder %s27, 1
      %p134 = scmp.ne.s32.totalorder %s129, %s131
      %p135 = scmp.eq.s32.totalorder %s27, 0
      %p136 = por %p134, %p135
      %p137 = scmp.ne.s32.totalorder %s129, %s131
      %p138 = scmp.eq.s32.totalorder %s32, 1
      %p139 = por %p137, %p138
      %p140 = scmp.ne.s32.totalorder %s131, %s132
      %p141 = scmp.eq.s32.totalorder %s32, 0
      %p142 = por %p140, %p141
      %p143 = scmp.ne.s32.totalorder %s131, %s132
      %p144 = scmp.eq.s32.totalorder %s33, 1
      %p145 = por %p143, %p144
      %p147 = scmp.ne.s32.totalorder %s132, %s146
      %p148 = scmp.eq.s32.totalorder %s33, 0
      %p149 = por %p147, %p148
      %s151 = sadd.s32 %s150, 1
      %p154 = scmp.eq.s32.totalorder %s27, 1
      %p155 = scmp.ne.s32.totalorder %s150, %s152
      %p156 = scmp.eq.s32.totalorder %s27, 0
      %p157 = por %p155, %p156
      %p158 = scmp.ne.s32.totalorder %s150, %s152
      %p159 = scmp.eq.s32.totalorder %s32, 1
      %p160 = por %p158, %p159
      %p161 = scmp.ne.s32.totalorder %s152, %s153
      %p162 = scmp.eq.s32.totalorder %s32, 0
      %p163 = por %p161, %p162
      %p164 = scmp.ne.s32.totalorder %s152, %s153
      %p165 = scmp.eq.s32.totalorder %s33, 1
      %p166 = por %p164, %p165
      %p168 = scmp.ne.s32.totalorder %s153, %s167
      %p169 = scmp.eq.s32.totalorder %s33, 0
      %p170 = por %p168, %p169
      %s171 = ssub.s32 %s27, %s34
      %p172 = scmp.eq.s32.totalorder %s171, 0
      %s174 = sadd.s32 %s173, 1
      %s175 = scalar_select %p172, %s173, %s174
      %p178 = pneg %p172
      %p179 = scmp.eq.s32.totalorder %s27, 1
      %p180 = por %p178, %p179
      %p181 = scmp.ne.s32.totalorder %s173, %s176
      %p182 = scmp.eq.s32.totalorder %s27, 0
      %p183 = por %p181, %p182
      %p184 = scmp.ne.s32.totalorder %s173, %s176
      %p185 = scmp.eq.s32.totalorder %s32, 1
      %p186 = por %p184, %p185
      %p187 = scmp.ne.s32.totalorder %s176, %s177
      %p188 = scmp.eq.s32.totalorder %s32, 0
      %p189 = por %p187, %p188
      %p190 = scmp.ne.s32.totalorder %s176, %s177
      %p191 = scmp.eq.s32.totalorder %s33, 1
      %p192 = por %p190, %p191
      %p194 = scmp.ne.s32.totalorder %s177, %s193
      %p195 = scmp.eq.s32.totalorder %s33, 0
      %p196 = por %p194, %p195
      %s197 = ssub.s32 %s27, %s34
      %p198 = scmp.eq.s32.totalorder %s197, 0
      %s200 = sadd.s32 %s199, 1
      %s201 = scalar_select %p198, %s199, %s200
      %p204 = pneg %p198
      %p205 = scmp.eq.s32.totalorder %s27, 1
      %p206 = por %p204, %p205
      %p207 = scmp.ne.s32.totalorder %s199, %s202
      %p208 = scmp.eq.s32.totalorder %s27, 0
      %p209 = por %p207, %p208
      %p210 = scmp.ne.s32.totalorder %s199, %s202
      %p211 = scmp.eq.s32.totalorder %s32, 1
      %p212 = por %p210, %p211
      %p213 = scmp.ne.s32.totalorder %s202, %s203
      %p214 = scmp.eq.s32.totalorder %s32, 0
      %p215 = por %p213, %p214
      %p216 = scmp.ne.s32.totalorder %s202, %s203
      %p217 = scmp.eq.s32.totalorder %s33, 1
      %p218 = por %p216, %p217
      %p220 = scmp.ne.s32.totalorder %s203, %s219
      %p221 = scmp.eq.s32.totalorder %s33, 0
      %p222 = por %p220, %p221
      %p223 = scmp.le.s32.totalorder 1, %s27
      %p224 = scmp.lt.s32.totalorder %s27, 3
      %p225 = pnand %p223, %p224
      %p226 = pneg %p225
      // Predicated region
      $region9: #{tpu_custom_call.1} parent=5 // pred_check
        _
      $region10: #{tpu_custom_call.1} parent=5 // pred_check_branch
        %228 = sbr.rel (%p225) target = $region12
      $region11: #{tpu_custom_call.1} parent=5 // pred_region
        %s229 = ssub.s32 %s27, 1
        // Predicated region
        $region13: #{tpu_custom_call.1} parent=11 // pred_check
          %p230 = pneg %p100
        $region14: #{tpu_custom_call.1} parent=11 // pred_check_branch
          %232 = sbr.rel (%p230) target = $region16
        $region15: #{tpu_custom_call.1} parent=11 // pred_region
          %s234 = ssub.s32 8192, 8192
          %235 = vsyncadd [#allocation6], %s234
          %s236 = sshll.u32 [#allocation7], 4
          %s237 = int_to_ptr.vmem [resolvable:$true] %s236
          %242 = dma.hbm_to_vmem [thread:$0]  %s2, 8192, %s237, [#allocation6], 256, 256, 16
        $region16: #{tpu_custom_call.1} parent=11 // pred_fallthru
          _
        // Predicated region
        $region17: #{tpu_custom_call.1} parent=11 // pred_check
          %p243 = pneg %p121
        $region18: #{tpu_custom_call.1} parent=11 // pred_check_branch
          %245 = sbr.rel (%p243) target = $region20
        $region19: #{tpu_custom_call.1} parent=11 // pred_region
          _
        $region20: #{tpu_custom_call.1} parent=11 // pred_fallthru
          _
        // Predicated region
        $region21: #{tpu_custom_call.1} parent=11 // pred_check
          %p246 = pneg %p142
        $region22: #{tpu_custom_call.1} parent=11 // pred_check_branch
          %248 = sbr.rel (%p246) target = $region24
        $region23: #{tpu_custom_call.1} parent=11 // pred_region
          %s250 = ssub.s32 16384, 16384
          %251 = vsyncadd [#allocation9], %s250
          %s252 = sshll.u32 [#allocation8], 4
          %s253 = int_to_ptr.vmem [resolvable:$true] %s252
          %258 = dma.hbm_to_vmem [thread:$0]  %s4, 16384, %s253, [#allocation9], 512, 512, 32
        $region24: #{tpu_custom_call.1} parent=11 // pred_fallthru
          _
        // Predicated region
        $region25: #{tpu_custom_call.1} parent=11 // pred_check
          %p259 = pneg %p163
        $region26: #{tpu_custom_call.1} parent=11 // pred_check_branch
          %261 = sbr.rel (%p259) target = $region28
        $region27: #{tpu_custom_call.1} parent=11 // pred_region
          _
        $region28: #{tpu_custom_call.1} parent=11 // pred_fallthru
          _
      $region12: #{tpu_custom_call.1} parent=5 // pred_fallthru
        _
      %p262 = scmp.lt.s32.totalorder %s27, 2
      // Predicated region
      $region29: #{tpu_custom_call.1} parent=5 // pred_check
        %p263 = pneg %p262
      $region30: #{tpu_custom_call.1} parent=5 // pred_check_branch
        %265 = sbr.rel (%p263) target = $region32
      $region31: #{tpu_custom_call.1} parent=5 // pred_region
        // Predicated region
        $region33: #{tpu_custom_call.1} parent=31 // pred_check
          %p266 = pneg %p47
        $region34: #{tpu_custom_call.1} parent=31 // pred_check_branch
          %268 = sbr.rel (%p266) target = $region36
        $region35: #{tpu_custom_call.1} parent=31 // pred_region
          %s269 = sand.u32 %s37, 1
          %s270 = scalar_lea.sflag [#allocation3], %s269
          %s271 = sand.u32 %s37, 1
          %s272 = smul.addr %s271, 256
          %s273 = scalar_lea.vmem [#allocation2], %s272
          %s274 = smul.u32 16, %s27
          %s276 = ssub.s32 4096, 4096
          %277 = vsyncadd %s270, %s276
          %s278 = smul.addr %s274, 2
          %s279 = smul.addr %s278, 128
          %s280 = scalar_lea.hbm %s0, %s279
          %s281 = sshll.u32 %s273, 4
          %s282 = int_to_ptr.vmem [resolvable:$true] %s281
          %287 = dma.hbm_to_vmem [thread:$0]  %s280, 4096, %s282, %s270, 256, 256, 16
        $region36: #{tpu_custom_call.1} parent=31 // pred_fallthru
          _
        // Predicated region
        $region37: #{tpu_custom_call.1} parent=31 // pred_check
          %p288 = pneg %p73
        $region38: #{tpu_custom_call.1} parent=31 // pred_check_branch
          %290 = sbr.rel (%p288) target = $region40
        $region39: #{tpu_custom_call.1} parent=31 // pred_region
          %s291 = sand.u32 %s27, 1
          %s292 = scalar_lea.sflag [#allocation6], %s291
          %s293 = sand.u32 %s63, 1
          %s294 = smul.addr %s293, 256
          %s295 = scalar_lea.vmem [#allocation5], %s294
          %s296 = smul.u32 16, %s27
          %s298 = ssub.s32 4096, 4096
          %299 = vsyncadd %s292, %s298
          %s300 = smul.addr %s296, 2
          %s301 = smul.addr %s300, 128
          %s302 = scalar_lea.hbm %s1, %s301
          %s303 = sshll.u32 %s295, 4
          %s304 = int_to_ptr.vmem [resolvable:$true] %s303
          %309 = dma.hbm_to_vmem [thread:$0]  %s302, 4096, %s304, %s292, 256, 256, 16
        $region40: #{tpu_custom_call.1} parent=31 // pred_fallthru
          _
      $region32: #{tpu_custom_call.1} parent=5 // pred_fallthru
        _
      %p310 = scmp.le.s32.totalorder 1, %s27
      %p311 = scmp.lt.s32.totalorder %s27, 3
      %p312 = pnand %p310, %p311
      %p313 = pneg %p312
      // Predicated region
      $region41: #{tpu_custom_call.1} parent=5 // pred_check
        _
      $region42: #{tpu_custom_call.1} parent=5 // pred_check_branch
        %315 = sbr.rel (%p312) target = $region44
      $region43: #{tpu_custom_call.1} parent=5 // pred_region
        %s316 = ssub.s32 %s27, 1
        %s317 = sand.u32 %s40, 1
        %s318 = scalar_lea.sflag [#allocation3], %s317
        %s319 = sand.u32 %s40, 1
        %s320 = smul.addr %s319, 256
        %s321 = scalar_lea.vmem [#allocation2], %s320
        // Predicated region
        $region45: #{tpu_custom_call.1} parent=43 // pred_check
          %p322 = pneg %p53
        $region46: #{tpu_custom_call.1} parent=43 // pred_check_branch
          %324 = sbr.rel (%p322) target = $region48
        $region47: #{tpu_custom_call.1} parent=43 // pred_region
          %325 = dma.done %s318, 4096
        $region48: #{tpu_custom_call.1} parent=43 // pred_fallthru
          _
        %s326 = sand.u32 %s32, 1
        %s327 = scalar_lea.sflag [#allocation6], %s326
        %s328 = sand.u32 %s66, 1
        %s329 = smul.addr %s328, 256
        %s330 = scalar_lea.vmem [#allocation5], %s329
        // Predicated region
        $region49: #{tpu_custom_call.1} parent=43 // pred_check
          %p331 = pneg %p79
        $region50: #{tpu_custom_call.1} parent=43 // pred_check_branch
          %333 = sbr.rel (%p331) target = $region52
        $region51: #{tpu_custom_call.1} parent=43 // pred_region
          %334 = dma.done %s327, 4096
        $region52: #{tpu_custom_call.1} parent=43 // pred_fallthru
          _
        // Predicated region
        $region53: #{tpu_custom_call.1} parent=43 // pred_check
          %p335 = pneg %p100
        $region54: #{tpu_custom_call.1} parent=43 // pred_check_branch
          %337 = sbr.rel (%p335) target = $region56
        $region55: #{tpu_custom_call.1} parent=43 // pred_region
          %338 = dma.done [#allocation6], 8192
        $region56: #{tpu_custom_call.1} parent=43 // pred_fallthru
          _
        // Predicated region
        $region57: #{tpu_custom_call.1} parent=43 // pred_check
          %p339 = pneg %p142
        $region58: #{tpu_custom_call.1} parent=43 // pred_check_branch
          %341 = sbr.rel (%p339) target = $region60
        $region59: #{tpu_custom_call.1} parent=43 // pred_region
          %342 = dma.done [#allocation9], 16384
        $region60: #{tpu_custom_call.1} parent=43 // pred_fallthru
          _
        %s343 = sand.u32 %s40, 1
        %s344 = scalar_lea.sflag [#allocation3], %s343
        %s345 = sand.u32 %s40, 1
        %s346 = smul.addr %s345, 256
        %s347 = scalar_lea.vmem [#allocation2], %s346
        %p348 = pneg %p53
        %p349 = pneg %p50
        %s350 = sand.u32 %s32, 1
        %s351 = scalar_lea.sflag [#allocation6], %s350
        %s352 = sand.u32 %s66, 1
        %s353 = smul.addr %s352, 256
        %s354 = scalar_lea.vmem [#allocation5], %s353
        %p355 = pneg %p79
        %p356 = pneg %p76
        %p357 = pneg %p100
        %p358 = pneg %p97
        %p359 = pneg %p121
        %p360 = pneg %p118
        %p361 = pneg %p142
        %p362 = pneg %p139
        %p363 = pneg %p163
        %p364 = pneg %p160
        %p365 = pneg %p189
        %p366 = pneg %p186
        %s367 = sand.u32 %s176, 1
        %s368 = scalar_lea.sflag [#allocation4], %s367
        %s369 = sand.u32 %s176, 1
        %s370 = smul.addr %s369, 256
        %s371 = scalar_lea.vmem [#allocation10], %s370
        %p372 = pneg %p215
        %p373 = pneg %p212
        %s374 = sand.u32 %s202, 1
        %s375 = scalar_lea.sflag [#allocation12], %s374
        %s376 = sand.u32 %s202, 1
        %s377 = smul.addr %s376, 8
        %s378 = scalar_lea.vmem [#allocation11], %s377
        %s379 = smul.u32 16, %s32
        %s380 = smul.u32 16, %s32
        %s381 = smul.u32 16, %s32
        %v382 = vld [vmem:[%s321] sm:$0xff]
        %v383 = vld [vmem:[%s321 + $0x8] sm:$0xff]
        %v384 = vld [vmem:[%s321 + $0x10] sm:$0xff]
        %v385 = vld [vmem:[%s321 + $0x18] sm:$0xff]
        %v386 = vld [vmem:[%s321 + $0x20] sm:$0xff]
        %v387 = vld [vmem:[%s321 + $0x28] sm:$0xff]
        %v388 = vld [vmem:[%s321 + $0x30] sm:$0xff]
        %v389 = vld [vmem:[%s321 + $0x38] sm:$0xff]
        %v390 = vld [vmem:[%s321 + $0x40] sm:$0xff]
        %v391 = vld [vmem:[%s321 + $0x48] sm:$0xff]
        %v392 = vld [vmem:[%s321 + $0x50] sm:$0xff]
        %v393 = vld [vmem:[%s321 + $0x58] sm:$0xff]
        %v394 = vld [vmem:[%s321 + $0x60] sm:$0xff]
        %v395 = vld [vmem:[%s321 + $0x68] sm:$0xff]
        %v396 = vld [vmem:[%s321 + $0x70] sm:$0xff]
        %v397 = vld [vmem:[%s321 + $0x78] sm:$0xff]
        %v398 = vld [vmem:[%s321 + $0x80] sm:$0xff]
        %v399 = vld [vmem:[%s321 + $0x88] sm:$0xff]
        %v400 = vld [vmem:[%s321 + $0x90] sm:$0xff]
        %v401 = vld [vmem:[%s321 + $0x98] sm:$0xff]
        %v402 = vld [vmem:[%s321 + $0xa0] sm:$0xff]
        %v403 = vld [vmem:[%s321 + $0xa8] sm:$0xff]
        %v404 = vld [vmem:[%s321 + $0xb0] sm:$0xff]
        %v405 = vld [vmem:[%s321 + $0xb8] sm:$0xff]
        %v406 = vld [vmem:[%s321 + $0xc0] sm:$0xff]
        %v407 = vld [vmem:[%s321 + $0xc8] sm:$0xff]
        %v408 = vld [vmem:[%s321 + $0xd0] sm:$0xff]
        %v409 = vld [vmem:[%s321 + $0xd8] sm:$0xff]
        %v410 = vld [vmem:[%s321 + $0xe0] sm:$0xff]
        %v411 = vld [vmem:[%s321 + $0xe8] sm:$0xff]
        %v412 = vld [vmem:[%s321 + $0xf0] sm:$0xff]
        %v413 = vld [vmem:[%s321 + $0xf8] sm:$0xff]
        %v414 = vld [vmem:[#allocation7] sm:$0xff]
        %v415 = vld [vmem:[#allocation7 + $0x8] sm:$0xff]
        %v416 = vld [vmem:[#allocation7 + $0x10] sm:$0xff]
        %v417 = vld [vmem:[#allocation7 + $0x18] sm:$0xff]
        %v418 = vld [vmem:[#allocation7 + $0x20] sm:$0xff]
        %v419 = vld [vmem:[#allocation7 + $0x28] sm:$0xff]
        %v420 = vld [vmem:[#allocation7 + $0x30] sm:$0xff]
        %v421 = vld [vmem:[#allocation7 + $0x38] sm:$0xff]
        %v422 = vld [vmem:[#allocation7 + $0x40] sm:$0xff]
        %v423 = vld [vmem:[#allocation7 + $0x48] sm:$0xff]
        %v424 = vld [vmem:[#allocation7 + $0x50] sm:$0xff]
        %v425 = vld [vmem:[#allocation7 + $0x58] sm:$0xff]
        %v426 = vld [vmem:[#allocation7 + $0x60] sm:$0xff]
        %v427 = vld [vmem:[#allocation7 + $0x68] sm:$0xff]
        %v428 = vld [vmem:[#allocation7 + $0x70] sm:$0xff]
        %v429 = vld [vmem:[#allocation7 + $0x78] sm:$0xff]
        %v430 = vld [vmem:[#allocation7 + $0x80] sm:$0xff]
        %v431 = vld [vmem:[#allocation7 + $0x88] sm:$0xff]
        %v432 = vld [vmem:[#allocation7 + $0x90] sm:$0xff]
        %v433 = vld [vmem:[#allocation7 + $0x98] sm:$0xff]
        %v434 = vld [vmem:[#allocation7 + $0xa0] sm:$0xff]
        %v435 = vld [vmem:[#allocation7 + $0xa8] sm:$0xff]
        %v436 = vld [vmem:[#allocation7 + $0xb0] sm:$0xff]
        %v437 = vld [vmem:[#allocation7 + $0xb8] sm:$0xff]
        %v438 = vld [vmem:[#allocation7 + $0xc0] sm:$0xff]
        %v439 = vld [vmem:[#allocation7 + $0xc8] sm:$0xff]
        %v440 = vld [vmem:[#allocation7 + $0xd0] sm:$0xff]
        %v441 = vld [vmem:[#allocation7 + $0xd8] sm:$0xff]
        %v442 = vld [vmem:[#allocation7 + $0xe0] sm:$0xff]
        %v443 = vld [vmem:[#allocation7 + $0xe8] sm:$0xff]
        %v444 = vld [vmem:[#allocation7 + $0xf0] sm:$0xff]
        %v445 = vld [vmem:[#allocation7 + $0xf8] sm:$0xff]
        %v446 = vld [vmem:[#allocation7 + $0x100] sm:$0xff]
        %v447 = vld [vmem:[#allocation7 + $0x108] sm:$0xff]
        %v448 = vld [vmem:[#allocation7 + $0x110] sm:$0xff]
        %v449 = vld [vmem:[#allocation7 + $0x118] sm:$0xff]
        %v450 = vld [vmem:[#allocation7 + $0x120] sm:$0xff]
        %v451 = vld [vmem:[#allocation7 + $0x128] sm:$0xff]
        %v452 = vld [vmem:[#allocation7 + $0x130] sm:$0xff]
        %v453 = vld [vmem:[#allocation7 + $0x138] sm:$0xff]
        %v454 = vld [vmem:[#allocation7 + $0x140] sm:$0xff]
        %v455 = vld [vmem:[#allocation7 + $0x148] sm:$0xff]
        %v456 = vld [vmem:[#allocation7 + $0x150] sm:$0xff]
        %v457 = vld [vmem:[#allocation7 + $0x158] sm:$0xff]
        %v458 = vld [vmem:[#allocation7 + $0x160] sm:$0xff]
        %v459 = vld [vmem:[#allocation7 + $0x168] sm:$0xff]
        %v460 = vld [vmem:[#allocation7 + $0x170] sm:$0xff]
        %v461 = vld [vmem:[#allocation7 + $0x178] sm:$0xff]
        %v462 = vld [vmem:[#allocation7 + $0x180] sm:$0xff]
        %v463 = vld [vmem:[#allocation7 + $0x188] sm:$0xff]
        %v464 = vld [vmem:[#allocation7 + $0x190] sm:$0xff]
        %v465 = vld [vmem:[#allocation7 + $0x198] sm:$0xff]
        %v466 = vld [vmem:[#allocation7 + $0x1a0] sm:$0xff]
        %v467 = vld [vmem:[#allocation7 + $0x1a8] sm:$0xff]
        %v468 = vld [vmem:[#allocation7 + $0x1b0] sm:$0xff]
        %v469 = vld [vmem:[#allocation7 + $0x1b8] sm:$0xff]
        %v470 = vld [vmem:[#allocation7 + $0x1c0] sm:$0xff]
        %v471 = vld [vmem:[#allocation7 + $0x1c8] sm:$0xff]
        %v472 = vld [vmem:[#allocation7 + $0x1d0] sm:$0xff]
        %v473 = vld [vmem:[#allocation7 + $0x1d8] sm:$0xff]
        %v474 = vld [vmem:[#allocation7 + $0x1e0] sm:$0xff]
        %v475 = vld [vmem:[#allocation7 + $0x1e8] sm:$0xff]
        %v476 = vld [vmem:[#allocation7 + $0x1f0] sm:$0xff]
        %v477 = vld [vmem:[#allocation7 + $0x1f8] sm:$0xff]
        %v478 = vld [vmem:[%s3] sm:$0x3]
        %v480 = vlaneseq
        %v481 = vshrl.u32 %v480, 7
        %v482 = vsub.s32 0, %v481
        %v483 = vrot.slane %v478, %v482
        %v484 = vlaneseq
        %v485 = vshrl.u32 %v484, 7
        %v486 = vsub.s32 1, %v485
        %v487 = vrot.slane %v478, %v486
        %490 = vmatprep.subr.mxu0 %v445
        %491 = vmatpush1.msra.mxu0 %v444
        %492 = vmatprep.subr.mxu0 %v443
        %493 = vmatpush1.msra.mxu0 %v442
        %494 = vmatprep.subr.mxu0 %v441
        %495 = vmatpush1.msra.mxu0 %v440
        %496 = vmatprep.subr.mxu0 %v439
        %497 = vmatpush1.msra.mxu0 %v438
        %498 = vmatprep.subr.mxu0 %v437
        %499 = vmatpush1.msra.mxu0 %v436
        %500 = vmatprep.subr.mxu0 %v435
        %501 = vmatpush1.msra.mxu0 %v434
        %502 = vmatprep.subr.mxu0 %v433
        %503 = vmatpush1.msra.mxu0 %v432
        %504 = vmatprep.subr.mxu0 %v431
        %505 = vmatpush1.msra.mxu0 %v430
        %506 = vmatprep.subr.mxu0 %v429
        %507 = vmatpush1.msra.mxu0 %v428
        %508 = vmatprep.subr.mxu0 %v427
        %509 = vmatpush1.msra.mxu0 %v426
        %510 = vmatprep.subr.mxu0 %v425
        %511 = vmatpush1.msra.mxu0 %v424
        %512 = vmatprep.subr.mxu0 %v423
        %513 = vmatpush1.msra.mxu0 %v422
        %514 = vmatprep.subr.mxu0 %v421
        %515 = vmatpush1.msra.mxu0 %v420
        %516 = vmatprep.subr.mxu0 %v419
        %517 = vmatpush1.msra.mxu0 %v418
        %518 = vmatprep.subr.mxu0 %v417
        %519 = vmatpush1.msra.mxu0 %v416
        %520 = vmatprep.subr.mxu0 %v415
        %521 = vmatpush1.msra.mxu0 %v414
        %522 = vmatprep.subr.mxu0 %v477
        %523 = vmatpush2.msra.mxu0 %v476
        %524 = vmatprep.subr.mxu0 %v475
        %525 = vmatpush2.msra.mxu0 %v474
        %526 = vmatprep.subr.mxu0 %v473
        %527 = vmatpush2.msra.mxu0 %v472
        %528 = vmatprep.subr.mxu0 %v471
        %529 = vmatpush2.msra.mxu0 %v470
        %530 = vmatprep.subr.mxu0 %v469
        %531 = vmatpush2.msra.mxu0 %v468
        %532 = vmatprep.subr.mxu0 %v467
        %533 = vmatpush2.msra.mxu0 %v466
        %534 = vmatprep.subr.mxu0 %v465
        %535 = vmatpush2.msra.mxu0 %v464
        %536 = vmatprep.subr.mxu0 %v463
        %537 = vmatpush2.msra.mxu0 %v462
        %538 = vmatprep.subr.mxu0 %v461
        %539 = vmatpush2.msra.mxu0 %v460
        %540 = vmatprep.subr.mxu0 %v459
        %541 = vmatpush2.msra.mxu0 %v458
        %542 = vmatprep.subr.mxu0 %v457
        %543 = vmatpush2.msra.mxu0 %v456
        %544 = vmatprep.subr.mxu0 %v455
        %545 = vmatpush2.msra.mxu0 %v454
        %546 = vmatprep.subr.mxu0 %v453
        %547 = vmatpush2.msra.mxu0 %v452
        %548 = vmatprep.subr.mxu0 %v451
        %549 = vmatpush2.msra.mxu0 %v450
        %550 = vmatprep.subr.mxu0 %v449
        %551 = vmatpush2.msra.mxu0 %v448
        %552 = vmatprep.subr.mxu0 %v447
        %553 = vmatpush2.msra.mxu0 %v446
        %554 = vmatprep.mubr.f32.mxu0 %v383
        %555 = vmatmul.mubr.f32.gmra.mxu0 %v382
        %v556 = vpop.f32.mrf.mxu0
        %v557 = vadd.f32 %v483, %v556
        %v558 = vpop.f32.mrf.mxu0
        %v559 = vadd.f32 %v487, %v558
        %560 = vmatprep.mubr.f32.mxu0 %v385
        %561 = vmatmul.mubr.f32.gmra.mxu0 %v384
        %v562 = vpop.f32.mrf.mxu0
        %v563 = vadd.f32 %v483, %v562
        %v564 = vpop.f32.mrf.mxu0
        %v565 = vadd.f32 %v487, %v564
        %566 = vmatprep.mubr.f32.mxu0 %v387
        %567 = vmatmul.mubr.f32.gmra.mxu0 %v386
        %v568 = vpop.f32.mrf.mxu0
        %v569 = vadd.f32 %v483, %v568
        %v570 = vpop.f32.mrf.mxu0
        %v571 = vadd.f32 %v487, %v570
        %572 = vmatprep.mubr.f32.mxu0 %v389
        %573 = vmatmul.mubr.f32.gmra.mxu0 %v388
        %v574 = vpop.f32.mrf.mxu0
        %v575 = vadd.f32 %v483, %v574
        %v576 = vpop.f32.mrf.mxu0
        %v577 = vadd.f32 %v487, %v576
        %578 = vmatprep.mubr.f32.mxu0 %v391
        %579 = vmatmul.mubr.f32.gmra.mxu0 %v390
        %v580 = vpop.f32.mrf.mxu0
        %v581 = vadd.f32 %v483, %v580
        %v582 = vpop.f32.mrf.mxu0
        %v583 = vadd.f32 %v487, %v582
        %584 = vmatprep.mubr.f32.mxu0 %v393
        %585 = vmatmul.mubr.f32.gmra.mxu0 %v392
        %v586 = vpop.f32.mrf.mxu0
        %v587 = vadd.f32 %v483, %v586
        %v588 = vpop.f32.mrf.mxu0
        %v589 = vadd.f32 %v487, %v588
        %590 = vmatprep.mubr.f32.mxu0 %v395
        %591 = vmatmul.mubr.f32.gmra.mxu0 %v394
        %v592 = vpop.f32.mrf.mxu0
        %v593 = vadd.f32 %v483, %v592
        %v594 = vpop.f32.mrf.mxu0
        %v595 = vadd.f32 %v487, %v594
        %596 = vmatprep.mubr.f32.mxu0 %v397
        %597 = vmatmul.mubr.f32.gmra.mxu0 %v396
        %v598 = vpop.f32.mrf.mxu0
        %v599 = vadd.f32 %v483, %v598
        %v600 = vpop.f32.mrf.mxu0
        %v601 = vadd.f32 %v487, %v600
        %602 = vmatprep.mubr.f32.mxu0 %v399
        %603 = vmatmul.mubr.f32.gmra.mxu0 %v398
        %v604 = vpop.f32.mrf.mxu0
        %v605 = vadd.f32 %v483, %v604
        %v606 = vpop.f32.mrf.mxu0
        %v607 = vadd.f32 %v487, %v606
        %608 = vmatprep.mubr.f32.mxu0 %v401
        %609 = vmatmul.mubr.f32.gmra.mxu0 %v400
        %v610 = vpop.f32.mrf.mxu0
        %v611 = vadd.f32 %v483, %v610
        %v612 = vpop.f32.mrf.mxu0
        %v613 = vadd.f32 %v487, %v612
        %614 = vmatprep.mubr.f32.mxu0 %v403
        %615 = vmatmul.mubr.f32.gmra.mxu0 %v402
        %v616 = vpop.f32.mrf.mxu0
        %v617 = vadd.f32 %v483, %v616
        %v618 = vpop.f32.mrf.mxu0
        %v619 = vadd.f32 %v487, %v618
        %620 = vmatprep.mubr.f32.mxu0 %v405
        %621 = vmatmul.mubr.f32.gmra.mxu0 %v404
        %v622 = vpop.f32.mrf.mxu0
        %v623 = vadd.f32 %v483, %v622
        %v624 = vpop.f32.mrf.mxu0
        %v625 = vadd.f32 %v487, %v624
        %626 = vmatprep.mubr.f32.mxu0 %v407
        %627 = vmatmul.mubr.f32.gmra.mxu0 %v406
        %v628 = vpop.f32.mrf.mxu0
        %v629 = vadd.f32 %v483, %v628
        %v630 = vpop.f32.mrf.mxu0
        %v631 = vadd.f32 %v487, %v630
        %632 = vmatprep.mubr.f32.mxu0 %v409
        %633 = vmatmul.mubr.f32.gmra.mxu0 %v408
        %v634 = vpop.f32.mrf.mxu0
        %v635 = vadd.f32 %v483, %v634
        %v636 = vpop.f32.mrf.mxu0
        %v637 = vadd.f32 %v487, %v636
        %638 = vmatprep.mubr.f32.mxu0 %v411
        %639 = vmatmul.mubr.f32.gmra.mxu0 %v410
        %v640 = vpop.f32.mrf.mxu0
        %v641 = vadd.f32 %v483, %v640
        %v642 = vpop.f32.mrf.mxu0
        %v643 = vadd.f32 %v487, %v642
        %644 = vmatprep.mubr.f32.mxu0 %v413
        %645 = vmatmul.mubr.f32.gmra.mxu0 %v412
        %v646 = vpop.f32.mrf.mxu0
        %v647 = vadd.f32 %v483, %v646
        %v648 = vpop.f32.mrf.mxu0
        %v649 = vadd.f32 %v487, %v648
        %650 = vdwg.mxu0
        %v651 = vmax.f32 %v557, 0.0
        %v652 = vmax.f32 %v559, 0.0
        %v653 = vmax.f32 %v563, 0.0
        %v654 = vmax.f32 %v565, 0.0
        %v655 = vmax.f32 %v569, 0.0
        %v656 = vmax.f32 %v571, 0.0
        %v657 = vmax.f32 %v575, 0.0
        %v658 = vmax.f32 %v577, 0.0
        %v659 = vmax.f32 %v581, 0.0
        %v660 = vmax.f32 %v583, 0.0
        %v661 = vmax.f32 %v587, 0.0
        %v662 = vmax.f32 %v589, 0.0
        %v663 = vmax.f32 %v593, 0.0
        %v664 = vmax.f32 %v595, 0.0
        %v665 = vmax.f32 %v599, 0.0
        %v666 = vmax.f32 %v601, 0.0
        %v667 = vmax.f32 %v605, 0.0
        %v668 = vmax.f32 %v607, 0.0
        %v669 = vmax.f32 %v611, 0.0
        %v670 = vmax.f32 %v613, 0.0
        %v671 = vmax.f32 %v617, 0.0
        %v672 = vmax.f32 %v619, 0.0
        %v673 = vmax.f32 %v623, 0.0
        %v674 = vmax.f32 %v625, 0.0
        %v675 = vmax.f32 %v629, 0.0
        %v676 = vmax.f32 %v631, 0.0
        %v677 = vmax.f32 %v635, 0.0
        %v678 = vmax.f32 %v637, 0.0
        %v679 = vmax.f32 %v641, 0.0
        %v680 = vmax.f32 %v643, 0.0
        %v681 = vmax.f32 %v647, 0.0
        %v682 = vmax.f32 %v649, 0.0
        %v683 = vld [vmem:[#allocation8] sm:$0xff]
        %v684 = vld [vmem:[#allocation8 + $0x8] sm:$0xff]
        %v685 = vld [vmem:[#allocation8 + $0x10] sm:$0xff]
        %v686 = vld [vmem:[#allocation8 + $0x18] sm:$0xff]
        %v687 = vld [vmem:[#allocation8 + $0x20] sm:$0xff]
        %v688 = vld [vmem:[#allocation8 + $0x28] sm:$0xff]
        %v689 = vld [vmem:[#allocation8 + $0x30] sm:$0xff]
        %v690 = vld [vmem:[#allocation8 + $0x38] sm:$0xff]
        %v691 = vld [vmem:[#allocation8 + $0x40] sm:$0xff]
        %v692 = vld [vmem:[#allocation8 + $0x48] sm:$0xff]
        %v693 = vld [vmem:[#allocation8 + $0x50] sm:$0xff]
        %v694 = vld [vmem:[#allocation8 + $0x58] sm:$0xff]
        %v695 = vld [vmem:[#allocation8 + $0x60] sm:$0xff]
        %v696 = vld [vmem:[#allocation8 + $0x68] sm:$0xff]
        %v697 = vld [vmem:[#allocation8 + $0x70] sm:$0xff]
        %v698 = vld [vmem:[#allocation8 + $0x78] sm:$0xff]
        %v699 = vld [vmem:[#allocation8 + $0x80] sm:$0xff]
        %v700 = vld [vmem:[#allocation8 + $0x88] sm:$0xff]
        %v701 = vld [vmem:[#allocation8 + $0x90] sm:$0xff]
        %v702 = vld [vmem:[#allocation8 + $0x98] sm:$0xff]
        %v703 = vld [vmem:[#allocation8 + $0xa0] sm:$0xff]
        %v704 = vld [vmem:[#allocation8 + $0xa8] sm:$0xff]
        %v705 = vld [vmem:[#allocation8 + $0xb0] sm:$0xff]
        %v706 = vld [vmem:[#allocation8 + $0xb8] sm:$0xff]
        %v707 = vld [vmem:[#allocation8 + $0xc0] sm:$0xff]
        %v708 = vld [vmem:[#allocation8 + $0xc8] sm:$0xff]
        %v709 = vld [vmem:[#allocation8 + $0xd0] sm:$0xff]
        %v710 = vld [vmem:[#allocation8 + $0xd8] sm:$0xff]
        %v711 = vld [vmem:[#allocation8 + $0xe0] sm:$0xff]
        %v712 = vld [vmem:[#allocation8 + $0xe8] sm:$0xff]
        %v713 = vld [vmem:[#allocation8 + $0xf0] sm:$0xff]
        %v714 = vld [vmem:[#allocation8 + $0xf8] sm:$0xff]
        %v715 = vld [vmem:[#allocation8 + $0x100] sm:$0xff]
        %v716 = vld [vmem:[#allocation8 + $0x108] sm:$0xff]
        %v717 = vld [vmem:[#allocation8 + $0x110] sm:$0xff]
        %v718 = vld [vmem:[#allocation8 + $0x118] sm:$0xff]
        %v719 = vld [vmem:[#allocation8 + $0x120] sm:$0xff]
        %v720 = vld [vmem:[#allocation8 + $0x128] sm:$0xff]
        %v721 = vld [vmem:[#allocation8 + $0x130] sm:$0xff]
        %v722 = vld [vmem:[#allocation8 + $0x138] sm:$0xff]
        %v723 = vld [vmem:[#allocation8 + $0x140] sm:$0xff]
        %v724 = vld [vmem:[#allocation8 + $0x148] sm:$0xff]
        %v725 = vld [vmem:[#allocation8 + $0x150] sm:$0xff]
        %v726 = vld [vmem:[#allocation8 + $0x158] sm:$0xff]
        %v727 = vld [vmem:[#allocation8 + $0x160] sm:$0xff]
        %v728 = vld [vmem:[#allocation8 + $0x168] sm:$0xff]
        %v729 = vld [vmem:[#allocation8 + $0x170] sm:$0xff]
        %v730 = vld [vmem:[#allocation8 + $0x178] sm:$0xff]
        %v731 = vld [vmem:[#allocation8 + $0x180] sm:$0xff]
        %v732 = vld [vmem:[#allocation8 + $0x188] sm:$0xff]
        %v733 = vld [vmem:[#allocation8 + $0x190] sm:$0xff]
        %v734 = vld [vmem:[#allocation8 + $0x198] sm:$0xff]
        %v735 = vld [vmem:[#allocation8 + $0x1a0] sm:$0xff]
        %v736 = vld [vmem:[#allocation8 + $0x1a8] sm:$0xff]
        %v737 = vld [vmem:[#allocation8 + $0x1b0] sm:$0xff]
        %v738 = vld [vmem:[#allocation8 + $0x1b8] sm:$0xff]
        %v739 = vld [vmem:[#allocation8 + $0x1c0] sm:$0xff]
        %v740 = vld [vmem:[#allocation8 + $0x1c8] sm:$0xff]
        %v741 = vld [vmem:[#allocation8 + $0x1d0] sm:$0xff]
        %v742 = vld [vmem:[#allocation8 + $0x1d8] sm:$0xff]
        %v743 = vld [vmem:[#allocation8 + $0x1e0] sm:$0xff]
        %v744 = vld [vmem:[#allocation8 + $0x1e8] sm:$0xff]
        %v745 = vld [vmem:[#allocation8 + $0x1f0] sm:$0xff]
        %v746 = vld [vmem:[#allocation8 + $0x1f8] sm:$0xff]
        %v747 = vld [vmem:[#allocation8 + $0x200] sm:$0xff]
        %v748 = vld [vmem:[#allocation8 + $0x208] sm:$0xff]
        %v749 = vld [vmem:[#allocation8 + $0x210] sm:$0xff]
        %v750 = vld [vmem:[#allocation8 + $0x218] sm:$0xff]
        %v751 = vld [vmem:[#allocation8 + $0x220] sm:$0xff]
        %v752 = vld [vmem:[#allocation8 + $0x228] sm:$0xff]
        %v753 = vld [vmem:[#allocation8 + $0x230] sm:$0xff]
        %v754 = vld [vmem:[#allocation8 + $0x238] sm:$0xff]
        %v755 = vld [vmem:[#allocation8 + $0x240] sm:$0xff]
        %v756 = vld [vmem:[#allocation8 + $0x248] sm:$0xff]
        %v757 = vld [vmem:[#allocation8 + $0x250] sm:$0xff]
        %v758 = vld [vmem:[#allocation8 + $0x258] sm:$0xff]
        %v759 = vld [vmem:[#allocation8 + $0x260] sm:$0xff]
        %v760 = vld [vmem:[#allocation8 + $0x268] sm:$0xff]
        %v761 = vld [vmem:[#allocation8 + $0x270] sm:$0xff]
        %v762 = vld [vmem:[#allocation8 + $0x278] sm:$0xff]
        %v763 = vld [vmem:[#allocation8 + $0x280] sm:$0xff]
        %v764 = vld [vmem:[#allocation8 + $0x288] sm:$0xff]
        %v765 = vld [vmem:[#allocation8 + $0x290] sm:$0xff]
        %v766 = vld [vmem:[#allocation8 + $0x298] sm:$0xff]
        %v767 = vld [vmem:[#allocation8 + $0x2a0] sm:$0xff]
        %v768 = vld [vmem:[#allocation8 + $0x2a8] sm:$0xff]
        %v769 = vld [vmem:[#allocation8 + $0x2b0] sm:$0xff]
        %v770 = vld [vmem:[#allocation8 + $0x2b8] sm:$0xff]
        %v771 = vld [vmem:[#allocation8 + $0x2c0] sm:$0xff]
        %v772 = vld [vmem:[#allocation8 + $0x2c8] sm:$0xff]
        %v773 = vld [vmem:[#allocation8 + $0x2d0] sm:$0xff]
        %v774 = vld [vmem:[#allocation8 + $0x2d8] sm:$0xff]
        %v775 = vld [vmem:[#allocation8 + $0x2e0] sm:$0xff]
        %v776 = vld [vmem:[#allocation8 + $0x2e8] sm:$0xff]
        %v777 = vld [vmem:[#allocation8 + $0x2f0] sm:$0xff]
        %v778 = vld [vmem:[#allocation8 + $0x2f8] sm:$0xff]
        %v779 = vld [vmem:[#allocation8 + $0x300] sm:$0xff]
        %v780 = vld [vmem:[#allocation8 + $0x308] sm:$0xff]
        %v781 = vld [vmem:[#allocation8 + $0x310] sm:$0xff]
        %v782 = vld [vmem:[#allocation8 + $0x318] sm:$0xff]
        %v783 = vld [vmem:[#allocation8 + $0x320] sm:$0xff]
        %v784 = vld [vmem:[#allocation8 + $0x328] sm:$0xff]
        %v785 = vld [vmem:[#allocation8 + $0x330] sm:$0xff]
        %v786 = vld [vmem:[#allocation8 + $0x338] sm:$0xff]
        %v787 = vld [vmem:[#allocation8 + $0x340] sm:$0xff]
        %v788 = vld [vmem:[#allocation8 + $0x348] sm:$0xff]
        %v789 = vld [vmem:[#allocation8 + $0x350] sm:$0xff]
        %v790 = vld [vmem:[#allocation8 + $0x358] sm:$0xff]
        %v791 = vld [vmem:[#allocation8 + $0x360] sm:$0xff]
        %v792 = vld [vmem:[#allocation8 + $0x368] sm:$0xff]
        %v793 = vld [vmem:[#allocation8 + $0x370] sm:$0xff]
        %v794 = vld [vmem:[#allocation8 + $0x378] sm:$0xff]
        %v795 = vld [vmem:[#allocation8 + $0x380] sm:$0xff]
        %v796 = vld [vmem:[#allocation8 + $0x388] sm:$0xff]
        %v797 = vld [vmem:[#allocation8 + $0x390] sm:$0xff]
        %v798 = vld [vmem:[#allocation8 + $0x398] sm:$0xff]
        %v799 = vld [vmem:[#allocation8 + $0x3a0] sm:$0xff]
        %v800 = vld [vmem:[#allocation8 + $0x3a8] sm:$0xff]
        %v801 = vld [vmem:[#allocation8 + $0x3b0] sm:$0xff]
        %v802 = vld [vmem:[#allocation8 + $0x3b8] sm:$0xff]
        %v803 = vld [vmem:[#allocation8 + $0x3c0] sm:$0xff]
        %v804 = vld [vmem:[#allocation8 + $0x3c8] sm:$0xff]
        %v805 = vld [vmem:[#allocation8 + $0x3d0] sm:$0xff]
        %v806 = vld [vmem:[#allocation8 + $0x3d8] sm:$0xff]
        %v807 = vld [vmem:[#allocation8 + $0x3e0] sm:$0xff]
        %v808 = vld [vmem:[#allocation8 + $0x3e8] sm:$0xff]
        %v809 = vld [vmem:[#allocation8 + $0x3f0] sm:$0xff]
        %v810 = vld [vmem:[#allocation8 + $0x3f8] sm:$0xff]
        %v811 = vld [vmem:[%s5] sm:$0xf]
        %v813 = vlaneseq
        %v814 = vshrl.u32 %v813, 7
        %v815 = vsub.s32 0, %v814
        %v816 = vrot.slane %v811, %v815
        %v817 = vlaneseq
        %v818 = vshrl.u32 %v817, 7
        %v819 = vsub.s32 1, %v818
        %v820 = vrot.slane %v811, %v819
        %v821 = vlaneseq
        %v822 = vshrl.u32 %v821, 7
        %v823 = vsub.s32 2, %v822
        %v824 = vrot.slane %v811, %v823
        %v825 = vlaneseq
        %v826 = vshrl.u32 %v825, 7
        %v827 = vsub.s32 3, %v826
        %v828 = vrot.slane %v811, %v827
        %833 = vmatprep.subr.mxu0 %v744
        %834 = vmatpush1.msra.mxu0 %v743
        %835 = vmatprep.subr.mxu0 %v740
        %836 = vmatpush1.msra.mxu0 %v739
        %837 = vmatprep.subr.mxu0 %v736
        %838 = vmatpush1.msra.mxu0 %v735
        %839 = vmatprep.subr.mxu0 %v732
        %840 = vmatpush1.msra.mxu0 %v731
        %841 = vmatprep.subr.mxu0 %v728
        %842 = vmatpush1.msra.mxu0 %v727
        %843 = vmatprep.subr.mxu0 %v724
        %844 = vmatpush1.msra.mxu0 %v723
        %845 = vmatprep.subr.mxu0 %v720
        %846 = vmatpush1.msra.mxu0 %v719
        %847 = vmatprep.subr.mxu0 %v716
        %848 = vmatpush1.msra.mxu0 %v715
        %849 = vmatprep.subr.mxu0 %v712
        %850 = vmatpush1.msra.mxu0 %v711
        %851 = vmatprep.subr.mxu0 %v708
        %852 = vmatpush1.msra.mxu0 %v707
        %853 = vmatprep.subr.mxu0 %v704
        %854 = vmatpush1.msra.mxu0 %v703
        %855 = vmatprep.subr.mxu0 %v700
        %856 = vmatpush1.msra.mxu0 %v699
        %857 = vmatprep.subr.mxu0 %v696
        %858 = vmatpush1.msra.mxu0 %v695
        %859 = vmatprep.subr.mxu0 %v692
        %860 = vmatpush1.msra.mxu0 %v691
        %861 = vmatprep.subr.mxu0 %v688
        %862 = vmatpush1.msra.mxu0 %v687
        %863 = vmatprep.subr.mxu0 %v684
        %864 = vmatpush1.msra.mxu0 %v683
        %865 = vmatprep.subr.mxu0 %v808
        %866 = vmatpush2.msra.mxu0 %v807
        %867 = vmatprep.subr.mxu0 %v804
        %868 = vmatpush2.msra.mxu0 %v803
        %869 = vmatprep.subr.mxu0 %v800
        %870 = vmatpush2.msra.mxu0 %v799
        %871 = vmatprep.subr.mxu0 %v796
        %872 = vmatpush2.msra.mxu0 %v795
        %873 = vmatprep.subr.mxu0 %v792
        %874 = vmatpush2.msra.mxu0 %v791
        %875 = vmatprep.subr.mxu0 %v788
        %876 = vmatpush2.msra.mxu0 %v787
        %877 = vmatprep.subr.mxu0 %v784
        %878 = vmatpush2.msra.mxu0 %v783
        %879 = vmatprep.subr.mxu0 %v780
        %880 = vmatpush2.msra.mxu0 %v779
        %881 = vmatprep.subr.mxu0 %v776
        %882 = vmatpush2.msra.mxu0 %v775
        %883 = vmatprep.subr.mxu0 %v772
        %884 = vmatpush2.msra.mxu0 %v771
        %885 = vmatprep.subr.mxu0 %v768
        %886 = vmatpush2.msra.mxu0 %v767
        %887 = vmatprep.subr.mxu0 %v764
        %888 = vmatpush2.msra.mxu0 %v763
        %889 = vmatprep.subr.mxu0 %v760
        %890 = vmatpush2.msra.mxu0 %v759
        %891 = vmatprep.subr.mxu0 %v756
        %892 = vmatpush2.msra.mxu0 %v755
        %893 = vmatprep.subr.mxu0 %v752
        %894 = vmatpush2.msra.mxu0 %v751
        %895 = vmatprep.subr.mxu0 %v748
        %896 = vmatpush2.msra.mxu0 %v747
        %897 = vmatprep.mubr.f32.mxu0 %v652
        %898 = vmatmul.mubr.f32.gmra.mxu0 %v651
        %v899 = vpop.f32.mrf.mxu0
        %v900 = vadd.f32 %v816, %v899
        %v901 = vpop.f32.mrf.mxu0
        %v902 = vadd.f32 %v820, %v901
        %903 = vmatprep.mubr.f32.mxu0 %v654
        %904 = vmatmul.mubr.f32.gmra.mxu0 %v653
        %v905 = vpop.f32.mrf.mxu0
        %v906 = vadd.f32 %v816, %v905
        %v907 = vpop.f32.mrf.mxu0
        %v908 = vadd.f32 %v820, %v907
        %909 = vmatprep.mubr.f32.mxu0 %v656
        %910 = vmatmul.mubr.f32.gmra.mxu0 %v655
        %v911 = vpop.f32.mrf.mxu0
        %v912 = vadd.f32 %v816, %v911
        %v913 = vpop.f32.mrf.mxu0
        %v914 = vadd.f32 %v820, %v913
        %915 = vmatprep.mubr.f32.mxu0 %v658
        %916 = vmatmul.mubr.f32.gmra.mxu0 %v657
        %v917 = vpop.f32.mrf.mxu0
        %v918 = vadd.f32 %v816, %v917
        %v919 = vpop.f32.mrf.mxu0
        %v920 = vadd.f32 %v820, %v919
        %921 = vmatprep.mubr.f32.mxu0 %v660
        %922 = vmatmul.mubr.f32.gmra.mxu0 %v659
        %v923 = vpop.f32.mrf.mxu0
        %v924 = vadd.f32 %v816, %v923
        %v925 = vpop.f32.mrf.mxu0
        %v926 = vadd.f32 %v820, %v925
        %927 = vmatprep.mubr.f32.mxu0 %v662
        %928 = vmatmul.mubr.f32.gmra.mxu0 %v661
        %v929 = vpop.f32.mrf.mxu0
        %v930 = vadd.f32 %v816, %v929
        %v931 = vpop.f32.mrf.mxu0
        %v932 = vadd.f32 %v820, %v931
        %933 = vmatprep.mubr.f32.mxu0 %v664
        %934 = vmatmul.mubr.f32.gmra.mxu0 %v663
        %v935 = vpop.f32.mrf.mxu0
        %v936 = vadd.f32 %v816, %v935
        %v937 = vpop.f32.mrf.mxu0
        %v938 = vadd.f32 %v820, %v937
        %939 = vmatprep.mubr.f32.mxu0 %v666
        %940 = vmatmul.mubr.f32.gmra.mxu0 %v665
        %v941 = vpop.f32.mrf.mxu0
        %v942 = vadd.f32 %v816, %v941
        %v943 = vpop.f32.mrf.mxu0
        %v944 = vadd.f32 %v820, %v943
        %945 = vmatprep.mubr.f32.mxu0 %v668
        %946 = vmatmul.mubr.f32.gmra.mxu0 %v667
        %v947 = vpop.f32.mrf.mxu0
        %v948 = vadd.f32 %v816, %v947
        %v949 = vpop.f32.mrf.mxu0
        %v950 = vadd.f32 %v820, %v949
        %951 = vmatprep.mubr.f32.mxu0 %v670
        %952 = vmatmul.mubr.f32.gmra.mxu0 %v669
        %v953 = vpop.f32.mrf.mxu0
        %v954 = vadd.f32 %v816, %v953
        %v955 = vpop.f32.mrf.mxu0
        %v956 = vadd.f32 %v820, %v955
        %957 = vmatprep.mubr.f32.mxu0 %v672
        %958 = vmatmul.mubr.f32.gmra.mxu0 %v671
        %v959 = vpop.f32.mrf.mxu0
        %v960 = vadd.f32 %v816, %v959
        %v961 = vpop.f32.mrf.mxu0
        %v962 = vadd.f32 %v820, %v961
        %963 = vmatprep.mubr.f32.mxu0 %v674
        %964 = vmatmul.mubr.f32.gmra.mxu0 %v673
        %v965 = vpop.f32.mrf.mxu0
        %v966 = vadd.f32 %v816, %v965
        %v967 = vpop.f32.mrf.mxu0
        %v968 = vadd.f32 %v820, %v967
        %969 = vmatprep.mubr.f32.mxu0 %v676
        %970 = vmatmul.mubr.f32.gmra.mxu0 %v675
        %v971 = vpop.f32.mrf.mxu0
        %v972 = vadd.f32 %v816, %v971
        %v973 = vpop.f32.mrf.mxu0
        %v974 = vadd.f32 %v820, %v973
        %975 = vmatprep.mubr.f32.mxu0 %v678
        %976 = vmatmul.mubr.f32.gmra.mxu0 %v677
        %v977 = vpop.f32.mrf.mxu0
        %v978 = vadd.f32 %v816, %v977
        %v979 = vpop.f32.mrf.mxu0
        %v980 = vadd.f32 %v820, %v979
        %981 = vmatprep.mubr.f32.mxu0 %v680
        %982 = vmatmul.mubr.f32.gmra.mxu0 %v679
        %v983 = vpop.f32.mrf.mxu0
        %v984 = vadd.f32 %v816, %v983
        %v985 = vpop.f32.mrf.mxu0
        %v986 = vadd.f32 %v820, %v985
        %987 = vmatprep.mubr.f32.mxu0 %v682
        %988 = vmatmul.mubr.f32.gmra.mxu0 %v681
        %v989 = vpop.f32.mrf.mxu0
        %v990 = vadd.f32 %v816, %v989
        %v991 = vpop.f32.mrf.mxu0
        %v992 = vadd.f32 %v820, %v991
        %993 = vdwg.mxu0
        %994 = vmatprep.subr.mxu0 %v746
        %995 = vmatpush1.msra.mxu0 %v745
        %996 = vmatprep.subr.mxu0 %v742
        %997 = vmatpush1.msra.mxu0 %v741
        %998 = vmatprep.subr.mxu0 %v738
        %999 = vmatpush1.msra.mxu0 %v737
        %1000 = vmatprep.subr.mxu0 %v734
        %1001 = vmatpush1.msra.mxu0 %v733
        %1002 = vmatprep.subr.mxu0 %v730
        %1003 = vmatpush1.msra.mxu0 %v729
        %1004 = vmatprep.subr.mxu0 %v726
        %1005 = vmatpush1.msra.mxu0 %v725
        %1006 = vmatprep.subr.mxu0 %v722
        %1007 = vmatpush1.msra.mxu0 %v721
        %1008 = vmatprep.subr.mxu0 %v718
        %1009 = vmatpush1.msra.mxu0 %v717
        %1010 = vmatprep.subr.mxu0 %v714
        %1011 = vmatpush1.msra.mxu0 %v713
        %1012 = vmatprep.subr.mxu0 %v710
        %1013 = vmatpush1.msra.mxu0 %v709
        %1014 = vmatprep.subr.mxu0 %v706
        %1015 = vmatpush1.msra.mxu0 %v705
        %1016 = vmatprep.subr.mxu0 %v702
        %1017 = vmatpush1.msra.mxu0 %v701
        %1018 = vmatprep.subr.mxu0 %v698
        %1019 = vmatpush1.msra.mxu0 %v697
        %1020 = vmatprep.subr.mxu0 %v694
        %1021 = vmatpush1.msra.mxu0 %v693
        %1022 = vmatprep.subr.mxu0 %v690
        %1023 = vmatpush1.msra.mxu0 %v689
        %1024 = vmatprep.subr.mxu0 %v686
        %1025 = vmatpush1.msra.mxu0 %v685
        %1026 = vmatprep.subr.mxu0 %v810
        %1027 = vmatpush2.msra.mxu0 %v809
        %1028 = vmatprep.subr.mxu0 %v806
        %1029 = vmatpush2.msra.mxu0 %v805
        %1030 = vmatprep.subr.mxu0 %v802
        %1031 = vmatpush2.msra.mxu0 %v801
        %1032 = vmatprep.subr.mxu0 %v798
        %1033 = vmatpush2.msra.mxu0 %v797
        %1034 = vmatprep.subr.mxu0 %v794
        %1035 = vmatpush2.msra.mxu0 %v793
        %1036 = vmatprep.subr.mxu0 %v790
        %1037 = vmatpush2.msra.mxu0 %v789
        %1038 = vmatprep.subr.mxu0 %v786
        %1039 = vmatpush2.msra.mxu0 %v785
        %1040 = vmatprep.subr.mxu0 %v782
        %1041 = vmatpush2.msra.mxu0 %v781
        %1042 = vmatprep.subr.mxu0 %v778
        %1043 = vmatpush2.msra.mxu0 %v777
        %1044 = vmatprep.subr.mxu0 %v774
        %1045 = vmatpush2.msra.mxu0 %v773
        %1046 = vmatprep.subr.mxu0 %v770
        %1047 = vmatpush2.msra.mxu0 %v769
        %1048 = vmatprep.subr.mxu0 %v766
        %1049 = vmatpush2.msra.mxu0 %v765
        %1050 = vmatprep.subr.mxu0 %v762
        %1051 = vmatpush2.msra.mxu0 %v761
        %1052 = vmatprep.subr.mxu0 %v758
        %1053 = vmatpush2.msra.mxu0 %v757
        %1054 = vmatprep.subr.mxu0 %v754
        %1055 = vmatpush2.msra.mxu0 %v753
        %1056 = vmatprep.subr.mxu0 %v750
        %1057 = vmatpush2.msra.mxu0 %v749
        %1058 = vmatprep.mubr.f32.mxu0 %v652
        %1059 = vmatmul.mubr.f32.gmra.mxu0 %v651
        %v1060 = vpop.f32.mrf.mxu0
        %v1061 = vadd.f32 %v824, %v1060
        %v1062 = vpop.f32.mrf.mxu0
        %v1063 = vadd.f32 %v828, %v1062
        %1064 = vmatprep.mubr.f32.mxu0 %v654
        %1065 = vmatmul.mubr.f32.gmra.mxu0 %v653
        %v1066 = vpop.f32.mrf.mxu0
        %v1067 = vadd.f32 %v824, %v1066
        %v1068 = vpop.f32.mrf.mxu0
        %v1069 = vadd.f32 %v828, %v1068
        %1070 = vmatprep.mubr.f32.mxu0 %v656
        %1071 = vmatmul.mubr.f32.gmra.mxu0 %v655
        %v1072 = vpop.f32.mrf.mxu0
        %v1073 = vadd.f32 %v824, %v1072
        %v1074 = vpop.f32.mrf.mxu0
        %v1075 = vadd.f32 %v828, %v1074
        %1076 = vmatprep.mubr.f32.mxu0 %v658
        %1077 = vmatmul.mubr.f32.gmra.mxu0 %v657
        %v1078 = vpop.f32.mrf.mxu0
        %v1079 = vadd.f32 %v824, %v1078
        %v1080 = vpop.f32.mrf.mxu0
        %v1081 = vadd.f32 %v828, %v1080
        %1082 = vmatprep.mubr.f32.mxu0 %v660
        %1083 = vmatmul.mubr.f32.gmra.mxu0 %v659
        %v1084 = vpop.f32.mrf.mxu0
        %v1085 = vadd.f32 %v824, %v1084
        %v1086 = vpop.f32.mrf.mxu0
        %v1087 = vadd.f32 %v828, %v1086
        %1088 = vmatprep.mubr.f32.mxu0 %v662
        %1089 = vmatmul.mubr.f32.gmra.mxu0 %v661
        %v1090 = vpop.f32.mrf.mxu0
        %v1091 = vadd.f32 %v824, %v1090
        %v1092 = vpop.f32.mrf.mxu0
        %v1093 = vadd.f32 %v828, %v1092
        %1094 = vmatprep.mubr.f32.mxu0 %v664
        %1095 = vmatmul.mubr.f32.gmra.mxu0 %v663
        %v1096 = vpop.f32.mrf.mxu0
        %v1097 = vadd.f32 %v824, %v1096
        %v1098 = vpop.f32.mrf.mxu0
        %v1099 = vadd.f32 %v828, %v1098
        %1100 = vmatprep.mubr.f32.mxu0 %v666
        %1101 = vmatmul.mubr.f32.gmra.mxu0 %v665
        %v1102 = vpop.f32.mrf.mxu0
        %v1103 = vadd.f32 %v824, %v1102
        %v1104 = vpop.f32.mrf.mxu0
        %v1105 = vadd.f32 %v828, %v1104
        %1106 = vmatprep.mubr.f32.mxu0 %v668
        %1107 = vmatmul.mubr.f32.gmra.mxu0 %v667
        %v1108 = vpop.f32.mrf.mxu0
        %v1109 = vadd.f32 %v824, %v1108
        %v1110 = vpop.f32.mrf.mxu0
        %v1111 = vadd.f32 %v828, %v1110
        %1112 = vmatprep.mubr.f32.mxu0 %v670
        %1113 = vmatmul.mubr.f32.gmra.mxu0 %v669
        %v1114 = vpop.f32.mrf.mxu0
        %v1115 = vadd.f32 %v824, %v1114
        %v1116 = vpop.f32.mrf.mxu0
        %v1117 = vadd.f32 %v828, %v1116
        %1118 = vmatprep.mubr.f32.mxu0 %v672
        %1119 = vmatmul.mubr.f32.gmra.mxu0 %v671
        %v1120 = vpop.f32.mrf.mxu0
        %v1121 = vadd.f32 %v824, %v1120
        %v1122 = vpop.f32.mrf.mxu0
        %v1123 = vadd.f32 %v828, %v1122
        %1124 = vmatprep.mubr.f32.mxu0 %v674
        %1125 = vmatmul.mubr.f32.gmra.mxu0 %v673
        %v1126 = vpop.f32.mrf.mxu0
        %v1127 = vadd.f32 %v824, %v1126
        %v1128 = vpop.f32.mrf.mxu0
        %v1129 = vadd.f32 %v828, %v1128
        %1130 = vmatprep.mubr.f32.mxu0 %v676
        %1131 = vmatmul.mubr.f32.gmra.mxu0 %v675
        %v1132 = vpop.f32.mrf.mxu0
        %v1133 = vadd.f32 %v824, %v1132
        %v1134 = vpop.f32.mrf.mxu0
        %v1135 = vadd.f32 %v828, %v1134
        %1136 = vmatprep.mubr.f32.mxu0 %v678
        %1137 = vmatmul.mubr.f32.gmra.mxu0 %v677
        %v1138 = vpop.f32.mrf.mxu0
        %v1139 = vadd.f32 %v824, %v1138
        %v1140 = vpop.f32.mrf.mxu0
        %v1141 = vadd.f32 %v828, %v1140
        %1142 = vmatprep.mubr.f32.mxu0 %v680
        %1143 = vmatmul.mubr.f32.gmra.mxu0 %v679
        %v1144 = vpop.f32.mrf.mxu0
        %v1145 = vadd.f32 %v824, %v1144
        %v1146 = vpop.f32.mrf.mxu0
        %v1147 = vadd.f32 %v828, %v1146
        %1148 = vmatprep.mubr.f32.mxu0 %v682
        %1149 = vmatmul.mubr.f32.gmra.mxu0 %v681
        %v1150 = vpop.f32.mrf.mxu0
        %v1151 = vadd.f32 %v824, %v1150
        %v1152 = vpop.f32.mrf.mxu0
        %v1153 = vadd.f32 %v828, %v1152
        %1154 = vdwg.mxu0
        %v1155 = vmul.f32 %v1061, 0.5
        %v1156 = vmul.f32 %v1063, 0.5
        %v1157 = vmul.f32 %v1067, 0.5
        %v1158 = vmul.f32 %v1069, 0.5
        %v1159 = vmul.f32 %v1073, 0.5
        %v1160 = vmul.f32 %v1075, 0.5
        %v1161 = vmul.f32 %v1079, 0.5
        %v1162 = vmul.f32 %v1081, 0.5
        %v1163 = vmul.f32 %v1085, 0.5
        %v1164 = vmul.f32 %v1087, 0.5
        %v1165 = vmul.f32 %v1091, 0.5
        %v1166 = vmul.f32 %v1093, 0.5
        %v1167 = vmul.f32 %v1097, 0.5
        %v1168 = vmul.f32 %v1099, 0.5
        %v1169 = vmul.f32 %v1103, 0.5
        %v1170 = vmul.f32 %v1105, 0.5
        %v1171 = vmul.f32 %v1109, 0.5
        %v1172 = vmul.f32 %v1111, 0.5
        %v1173 = vmul.f32 %v1115, 0.5
        %v1174 = vmul.f32 %v1117, 0.5
        %v1175 = vmul.f32 %v1121, 0.5
        %v1176 = vmul.f32 %v1123, 0.5
        %v1177 = vmul.f32 %v1127, 0.5
        %v1178 = vmul.f32 %v1129, 0.5
        %v1179 = vmul.f32 %v1133, 0.5
        %v1180 = vmul.f32 %v1135, 0.5
        %v1181 = vmul.f32 %v1139, 0.5
        %v1182 = vmul.f32 %v1141, 0.5
        %v1183 = vmul.f32 %v1145, 0.5
        %v1184 = vmul.f32 %v1147, 0.5
        %v1185 = vmul.f32 %v1151, 0.5
        %v1186 = vmul.f32 %v1153, 0.5
        %v1187 = vmul.f32 %v1155, 1.442695
        %v1188 = vpow.pop %v1187
        %v1189 = vmul.f32 %v1156, 1.442695
        %v1190 = vpow.pop %v1189
        %v1191 = vmul.f32 %v1157, 1.442695
        %v1192 = vpow.pop %v1191
        %v1193 = vmul.f32 %v1158, 1.442695
        %v1194 = vpow.pop %v1193
        %v1195 = vmul.f32 %v1159, 1.442695
        %v1196 = vpow.pop %v1195
        %v1197 = vmul.f32 %v1160, 1.442695
        %v1198 = vpow.pop %v1197
        %v1199 = vmul.f32 %v1161, 1.442695
        %v1200 = vpow.pop %v1199
        %v1201 = vmul.f32 %v1162, 1.442695
        %v1202 = vpow.pop %v1201
        %v1203 = vmul.f32 %v1163, 1.442695
        %v1204 = vpow.pop %v1203
        %v1205 = vmul.f32 %v1164, 1.442695
        %v1206 = vpow.pop %v1205
        %v1207 = vmul.f32 %v1165, 1.442695
        %v1208 = vpow.pop %v1207
        %v1209 = vmul.f32 %v1166, 1.442695
        %v1210 = vpow.pop %v1209
        %v1211 = vmul.f32 %v1167, 1.442695
        %v1212 = vpow.pop %v1211
        %v1213 = vmul.f32 %v1168, 1.442695
        %v1214 = vpow.pop %v1213
        %v1215 = vmul.f32 %v1169, 1.442695
        %v1216 = vpow.pop %v1215
        %v1217 = vmul.f32 %v1170, 1.442695
        %v1218 = vpow.pop %v1217
        %v1219 = vmul.f32 %v1171, 1.442695
        %v1220 = vpow.pop %v1219
        %v1221 = vmul.f32 %v1172, 1.442695
        %v1222 = vpow.pop %v1221
        %v1223 = vmul.f32 %v1173, 1.442695
        %v1224 = vpow.pop %v1223
        %v1225 = vmul.f32 %v1174, 1.442695
        %v1226 = vpow.pop %v1225
        %v1227 = vmul.f32 %v1175, 1.442695
        %v1228 = vpow.pop %v1227
        %v1229 = vmul.f32 %v1176, 1.442695
        %v1230 = vpow.pop %v1229
        %v1231 = vmul.f32 %v1177, 1.442695
        %v1232 = vpow.pop %v1231
        %v1233 = vmul.f32 %v1178, 1.442695
        %v1234 = vpow.pop %v1233
        %v1235 = vmul.f32 %v1179, 1.442695
        %v1236 = vpow.pop %v1235
        %v1237 = vmul.f32 %v1180, 1.442695
        %v1238 = vpow.pop %v1237
        %v1239 = vmul.f32 %v1181, 1.442695
        %v1240 = vpow.pop %v1239
        %v1241 = vmul.f32 %v1182, 1.442695
        %v1242 = vpow.pop %v1241
        %v1243 = vmul.f32 %v1183, 1.442695
        %v1244 = vpow.pop %v1243
        %v1245 = vmul.f32 %v1184, 1.442695
        %v1246 = vpow.pop %v1245
        %v1247 = vmul.f32 %v1185, 1.442695
        %v1248 = vpow.pop %v1247
        %v1249 = vmul.f32 %v1186, 1.442695
        %v1250 = vpow.pop %v1249
        %v1251 = vld [vmem:[%s330] sm:$0xff]
        %v1252 = vld [vmem:[%s330 + $0x8] sm:$0xff]
        %v1253 = vld [vmem:[%s330 + $0x10] sm:$0xff]
        %v1254 = vld [vmem:[%s330 + $0x18] sm:$0xff]
        %v1255 = vld [vmem:[%s330 + $0x20] sm:$0xff]
        %v1256 = vld [vmem:[%s330 + $0x28] sm:$0xff]
        %v1257 = vld [vmem:[%s330 + $0x30] sm:$0xff]
        %v1258 = vld [vmem:[%s330 + $0x38] sm:$0xff]
        %v1259 = vld [vmem:[%s330 + $0x40] sm:$0xff]
        %v1260 = vld [vmem:[%s330 + $0x48] sm:$0xff]
        %v1261 = vld [vmem:[%s330 + $0x50] sm:$0xff]
        %v1262 = vld [vmem:[%s330 + $0x58] sm:$0xff]
        %v1263 = vld [vmem:[%s330 + $0x60] sm:$0xff]
        %v1264 = vld [vmem:[%s330 + $0x68] sm:$0xff]
        %v1265 = vld [vmem:[%s330 + $0x70] sm:$0xff]
        %v1266 = vld [vmem:[%s330 + $0x78] sm:$0xff]
        %v1267 = vld [vmem:[%s330 + $0x80] sm:$0xff]
        %v1268 = vld [vmem:[%s330 + $0x88] sm:$0xff]
        %v1269 = vld [vmem:[%s330 + $0x90] sm:$0xff]
        %v1270 = vld [vmem:[%s330 + $0x98] sm:$0xff]
        %v1271 = vld [vmem:[%s330 + $0xa0] sm:$0xff]
        %v1272 = vld [vmem:[%s330 + $0xa8] sm:$0xff]
        %v1273 = vld [vmem:[%s330 + $0xb0] sm:$0xff]
        %v1274 = vld [vmem:[%s330 + $0xb8] sm:$0xff]
        %v1275 = vld [vmem:[%s330 + $0xc0] sm:$0xff]
        %v1276 = vld [vmem:[%s330 + $0xc8] sm:$0xff]
        %v1277 = vld [vmem:[%s330 + $0xd0] sm:$0xff]
        %v1278 = vld [vmem:[%s330 + $0xd8] sm:$0xff]
        %v1279 = vld [vmem:[%s330 + $0xe0] sm:$0xff]
        %v1280 = vld [vmem:[%s330 + $0xe8] sm:$0xff]
        %v1281 = vld [vmem:[%s330 + $0xf0] sm:$0xff]
        %v1282 = vld [vmem:[%s330 + $0xf8] sm:$0xff]
        %v1283 = vmul.f32 %v1251, %v1188
        %v1284 = vmul.f32 %v1252, %v1190
        %v1285 = vmul.f32 %v1253, %v1192
        %v1286 = vmul.f32 %v1254, %v1194
        %v1287 = vmul.f32 %v1255, %v1196
        %v1288 = vmul.f32 %v1256, %v1198
        %v1289 = vmul.f32 %v1257, %v1200
        %v1290 = vmul.f32 %v1258, %v1202
        %v1291 = vmul.f32 %v1259, %v1204
        %v1292 = vmul.f32 %v1260, %v1206
        %v1293 = vmul.f32 %v1261, %v1208
        %v1294 = vmul.f32 %v1262, %v1210
        %v1295 = vmul.f32 %v1263, %v1212
        %v1296 = vmul.f32 %v1264, %v1214
        %v1297 = vmul.f32 %v1265, %v1216
        %v1298 = vmul.f32 %v1266, %v1218
        %v1299 = vmul.f32 %v1267, %v1220
        %v1300 = vmul.f32 %v1268, %v1222
        %v1301 = vmul.f32 %v1269, %v1224
        %v1302 = vmul.f32 %v1270, %v1226
        %v1303 = vmul.f32 %v1271, %v1228
        %v1304 = vmul.f32 %v1272, %v1230
        %v1305 = vmul.f32 %v1273, %v1232
        %v1306 = vmul.f32 %v1274, %v1234
        %v1307 = vmul.f32 %v1275, %v1236
        %v1308 = vmul.f32 %v1276, %v1238
        %v1309 = vmul.f32 %v1277, %v1240
        %v1310 = vmul.f32 %v1278, %v1242
        %v1311 = vmul.f32 %v1279, %v1244
        %v1312 = vmul.f32 %v1280, %v1246
        %v1313 = vmul.f32 %v1281, %v1248
        %v1314 = vmul.f32 %v1282, %v1250
        %v1315 = vadd.f32 %v900, %v1283
        %v1316 = vadd.f32 %v902, %v1284
        %v1317 = vadd.f32 %v906, %v1285
        %v1318 = vadd.f32 %v908, %v1286
        %v1319 = vadd.f32 %v912, %v1287
        %v1320 = vadd.f32 %v914, %v1288
        %v1321 = vadd.f32 %v918, %v1289
        %v1322 = vadd.f32 %v920, %v1290
        %v1323 = vadd.f32 %v924, %v1291
        %v1324 = vadd.f32 %v926, %v1292
        %v1325 = vadd.f32 %v930, %v1293
        %v1326 = vadd.f32 %v932, %v1294
        %v1327 = vadd.f32 %v936, %v1295
        %v1328 = vadd.f32 %v938, %v1296
        %v1329 = vadd.f32 %v942, %v1297
        %v1330 = vadd.f32 %v944, %v1298
        %v1331 = vadd.f32 %v948, %v1299
        %v1332 = vadd.f32 %v950, %v1300
        %v1333 = vadd.f32 %v954, %v1301
        %v1334 = vadd.f32 %v956, %v1302
        %v1335 = vadd.f32 %v960, %v1303
        %v1336 = vadd.f32 %v962, %v1304
        %v1337 = vadd.f32 %v966, %v1305
        %v1338 = vadd.f32 %v968, %v1306
        %v1339 = vadd.f32 %v972, %v1307
        %v1340 = vadd.f32 %v974, %v1308
        %v1341 = vadd.f32 %v978, %v1309
        %v1342 = vadd.f32 %v980, %v1310
        %v1343 = vadd.f32 %v984, %v1311
        %v1344 = vadd.f32 %v986, %v1312
        %v1345 = vadd.f32 %v990, %v1313
        %v1346 = vadd.f32 %v992, %v1314
        %1347 = vst [vmem:[%s371] sm:$0xff] %v1315
        %1348 = vst [vmem:[%s371 + $0x8] sm:$0xff] %v1316
        %1349 = vst [vmem:[%s371 + $0x10] sm:$0xff] %v1317
        %1350 = vst [vmem:[%s371 + $0x18] sm:$0xff] %v1318
        %1351 = vst [vmem:[%s371 + $0x20] sm:$0xff] %v1319
        %1352 = vst [vmem:[%s371 + $0x28] sm:$0xff] %v1320
        %1353 = vst [vmem:[%s371 + $0x30] sm:$0xff] %v1321
        %1354 = vst [vmem:[%s371 + $0x38] sm:$0xff] %v1322
        %1355 = vst [vmem:[%s371 + $0x40] sm:$0xff] %v1323
        %1356 = vst [vmem:[%s371 + $0x48] sm:$0xff] %v1324
        %1357 = vst [vmem:[%s371 + $0x50] sm:$0xff] %v1325
        %1358 = vst [vmem:[%s371 + $0x58] sm:$0xff] %v1326
        %1359 = vst [vmem:[%s371 + $0x60] sm:$0xff] %v1327
        %1360 = vst [vmem:[%s371 + $0x68] sm:$0xff] %v1328
        %1361 = vst [vmem:[%s371 + $0x70] sm:$0xff] %v1329
        %1362 = vst [vmem:[%s371 + $0x78] sm:$0xff] %v1330
        %1363 = vst [vmem:[%s371 + $0x80] sm:$0xff] %v1331
        %1364 = vst [vmem:[%s371 + $0x88] sm:$0xff] %v1332
        %1365 = vst [vmem:[%s371 + $0x90] sm:$0xff] %v1333
        %1366 = vst [vmem:[%s371 + $0x98] sm:$0xff] %v1334
        %1367 = vst [vmem:[%s371 + $0xa0] sm:$0xff] %v1335
        %1368 = vst [vmem:[%s371 + $0xa8] sm:$0xff] %v1336
        %1369 = vst [vmem:[%s371 + $0xb0] sm:$0xff] %v1337
        %1370 = vst [vmem:[%s371 + $0xb8] sm:$0xff] %v1338
        %1371 = vst [vmem:[%s371 + $0xc0] sm:$0xff] %v1339
        %1372 = vst [vmem:[%s371 + $0xc8] sm:$0xff] %v1340
        %1373 = vst [vmem:[%s371 + $0xd0] sm:$0xff] %v1341
        %1374 = vst [vmem:[%s371 + $0xd8] sm:$0xff] %v1342
        %1375 = vst [vmem:[%s371 + $0xe0] sm:$0xff] %v1343
        %1376 = vst [vmem:[%s371 + $0xe8] sm:$0xff] %v1344
        %1377 = vst [vmem:[%s371 + $0xf0] sm:$0xff] %v1345
        %1378 = vst [vmem:[%s371 + $0xf8] sm:$0xff] %v1346
        %v1379 = vadd.f32 %v1061, 1.0
        %v1380 = vadd.f32 %v1063, 1.0
        %v1381 = vadd.f32 %v1067, 1.0
        %v1382 = vadd.f32 %v1069, 1.0
        %v1383 = vadd.f32 %v1073, 1.0
        %v1384 = vadd.f32 %v1075, 1.0
        %v1385 = vadd.f32 %v1079, 1.0
        %v1386 = vadd.f32 %v1081, 1.0
        %v1387 = vadd.f32 %v1085, 1.0
        %v1388 = vadd.f32 %v1087, 1.0
        %v1389 = vadd.f32 %v1091, 1.0
        %v1390 = vadd.f32 %v1093, 1.0
        %v1391 = vadd.f32 %v1097, 1.0
        %v1392 = vadd.f32 %v1099, 1.0
        %v1393 = vadd.f32 %v1103, 1.0
        %v1394 = vadd.f32 %v1105, 1.0
        %v1395 = vadd.f32 %v1109, 1.0
        %v1396 = vadd.f32 %v1111, 1.0
        %v1397 = vadd.f32 %v1115, 1.0
        %v1398 = vadd.f32 %v1117, 1.0
        %v1399 = vadd.f32 %v1121, 1.0
        %v1400 = vadd.f32 %v1123, 1.0
        %v1401 = vadd.f32 %v1127, 1.0
        %v1402 = vadd.f32 %v1129, 1.0
        %v1403 = vadd.f32 %v1133, 1.0
        %v1404 = vadd.f32 %v1135, 1.0
        %v1405 = vadd.f32 %v1139, 1.0
        %v1406 = vadd.f32 %v1141, 1.0
        %v1407 = vadd.f32 %v1145, 1.0
        %v1408 = vadd.f32 %v1147, 1.0
        %v1409 = vadd.f32 %v1151, 1.0
        %v1410 = vadd.f32 %v1153, 1.0
        %v1411 = vmul.f32 %v900, %v900
        %v1412 = vmul.f32 %v902, %v902
        %v1413 = vmul.f32 %v906, %v906
        %v1414 = vmul.f32 %v908, %v908
        %v1415 = vmul.f32 %v912, %v912
        %v1416 = vmul.f32 %v914, %v914
        %v1417 = vmul.f32 %v918, %v918
        %v1418 = vmul.f32 %v920, %v920
        %v1419 = vmul.f32 %v924, %v924
        %v1420 = vmul.f32 %v926, %v926
        %v1421 = vmul.f32 %v930, %v930
        %v1422 = vmul.f32 %v932, %v932
        %v1423 = vmul.f32 %v936, %v936
        %v1424 = vmul.f32 %v938, %v938
        %v1425 = vmul.f32 %v942, %v942
        %v1426 = vmul.f32 %v944, %v944
        %v1427 = vmul.f32 %v948, %v948
        %v1428 = vmul.f32 %v950, %v950
        %v1429 = vmul.f32 %v954, %v954
        %v1430 = vmul.f32 %v956, %v956
        %v1431 = vmul.f32 %v960, %v960
        %v1432 = vmul.f32 %v962, %v962
        %v1433 = vmul.f32 %v966, %v966
        %v1434 = vmul.f32 %v968, %v968
        %v1435 = vmul.f32 %v972, %v972
        %v1436 = vmul.f32 %v974, %v974
        %v1437 = vmul.f32 %v978, %v978
        %v1438 = vmul.f32 %v980, %v980
        %v1439 = vmul.f32 %v984, %v984
        %v1440 = vmul.f32 %v986, %v986
        %v1441 = vmul.f32 %v990, %v990
        %v1442 = vmul.f32 %v992, %v992
        %v1443 = vsub.f32 %v1379, %v1411
        %v1444 = vsub.f32 %v1380, %v1412
        %v1445 = vsub.f32 %v1381, %v1413
        %v1446 = vsub.f32 %v1382, %v1414
        %v1447 = vsub.f32 %v1383, %v1415
        %v1448 = vsub.f32 %v1384, %v1416
        %v1449 = vsub.f32 %v1385, %v1417
        %v1450 = vsub.f32 %v1386, %v1418
        %v1451 = vsub.f32 %v1387, %v1419
        %v1452 = vsub.f32 %v1388, %v1420
        %v1453 = vsub.f32 %v1389, %v1421
        %v1454 = vsub.f32 %v1390, %v1422
        %v1455 = vsub.f32 %v1391, %v1423
        %v1456 = vsub.f32 %v1392, %v1424
        %v1457 = vsub.f32 %v1393, %v1425
        %v1458 = vsub.f32 %v1394, %v1426
        %v1459 = vsub.f32 %v1395, %v1427
        %v1460 = vsub.f32 %v1396, %v1428
        %v1461 = vsub.f32 %v1397, %v1429
        %v1462 = vsub.f32 %v1398, %v1430
        %v1463 = vsub.f32 %v1399, %v1431
        %v1464 = vsub.f32 %v1400, %v1432
        %v1465 = vsub.f32 %v1401, %v1433
        %v1466 = vsub.f32 %v1402, %v1434
        %v1467 = vsub.f32 %v1403, %v1435
        %v1468 = vsub.f32 %v1404, %v1436
        %v1469 = vsub.f32 %v1405, %v1437
        %v1470 = vsub.f32 %v1406, %v1438
        %v1471 = vsub.f32 %v1407, %v1439
        %v1472 = vsub.f32 %v1408, %v1440
        %v1473 = vsub.f32 %v1409, %v1441
        %v1474 = vsub.f32 %v1410, %v1442
        %v1475 = vmul.f32 %v1188, %v1188
        %v1476 = vmul.f32 %v1190, %v1190
        %v1477 = vmul.f32 %v1192, %v1192
        %v1478 = vmul.f32 %v1194, %v1194
        %v1479 = vmul.f32 %v1196, %v1196
        %v1480 = vmul.f32 %v1198, %v1198
        %v1481 = vmul.f32 %v1200, %v1200
        %v1482 = vmul.f32 %v1202, %v1202
        %v1483 = vmul.f32 %v1204, %v1204
        %v1484 = vmul.f32 %v1206, %v1206
        %v1485 = vmul.f32 %v1208, %v1208
        %v1486 = vmul.f32 %v1210, %v1210
        %v1487 = vmul.f32 %v1212, %v1212
        %v1488 = vmul.f32 %v1214, %v1214
        %v1489 = vmul.f32 %v1216, %v1216
        %v1490 = vmul.f32 %v1218, %v1218
        %v1491 = vmul.f32 %v1220, %v1220
        %v1492 = vmul.f32 %v1222, %v1222
        %v1493 = vmul.f32 %v1224, %v1224
        %v1494 = vmul.f32 %v1226, %v1226
        %v1495 = vmul.f32 %v1228, %v1228
        %v1496 = vmul.f32 %v1230, %v1230
        %v1497 = vmul.f32 %v1232, %v1232
        %v1498 = vmul.f32 %v1234, %v1234
        %v1499 = vmul.f32 %v1236, %v1236
        %v1500 = vmul.f32 %v1238, %v1238
        %v1501 = vmul.f32 %v1240, %v1240
        %v1502 = vmul.f32 %v1242, %v1242
        %v1503 = vmul.f32 %v1244, %v1244
        %v1504 = vmul.f32 %v1246, %v1246
        %v1505 = vmul.f32 %v1248, %v1248
        %v1506 = vmul.f32 %v1250, %v1250
        %v1507 = vsub.f32 %v1443, %v1475
        %v1508 = vsub.f32 %v1444, %v1476
        %v1509 = vsub.f32 %v1445, %v1477
        %v1510 = vsub.f32 %v1446, %v1478
        %v1511 = vsub.f32 %v1447, %v1479
        %v1512 = vsub.f32 %v1448, %v1480
        %v1513 = vsub.f32 %v1449, %v1481
        %v1514 = vsub.f32 %v1450, %v1482
        %v1515 = vsub.f32 %v1451, %v1483
        %v1516 = vsub.f32 %v1452, %v1484
        %v1517 = vsub.f32 %v1453, %v1485
        %v1518 = vsub.f32 %v1454, %v1486
        %v1519 = vsub.f32 %v1455, %v1487
        %v1520 = vsub.f32 %v1456, %v1488
        %v1521 = vsub.f32 %v1457, %v1489
        %v1522 = vsub.f32 %v1458, %v1490
        %v1523 = vsub.f32 %v1459, %v1491
        %v1524 = vsub.f32 %v1460, %v1492
        %v1525 = vsub.f32 %v1461, %v1493
        %v1526 = vsub.f32 %v1462, %v1494
        %v1527 = vsub.f32 %v1463, %v1495
        %v1528 = vsub.f32 %v1464, %v1496
        %v1529 = vsub.f32 %v1465, %v1497
        %v1530 = vsub.f32 %v1466, %v1498
        %v1531 = vsub.f32 %v1467, %v1499
        %v1532 = vsub.f32 %v1468, %v1500
        %v1533 = vsub.f32 %v1469, %v1501
        %v1534 = vsub.f32 %v1470, %v1502
        %v1535 = vsub.f32 %v1471, %v1503
        %v1536 = vsub.f32 %v1472, %v1504
        %v1537 = vsub.f32 %v1473, %v1505
        %v1538 = vsub.f32 %v1474, %v1506
        %v1539 = vadd.f32 %v1507, %v1508
        %1540 = vadd.xlane.f32.xlu0 %v1539
        %v1541 = vpop.xlane.xlu0 %1540
        %v1542 = vadd.f32 %v1509, %v1510
        %1543 = vadd.xlane.f32.xlu0 %v1542
        %v1544 = vpop.xlane.xlu0 %1543
        %v1545 = vadd.f32 %v1511, %v1512
        %1546 = vadd.xlane.f32.xlu0 %v1545
        %v1547 = vpop.xlane.xlu0 %1546
        %v1548 = vadd.f32 %v1513, %v1514
        %1549 = vadd.xlane.f32.xlu0 %v1548
        %v1550 = vpop.xlane.xlu0 %1549
        %v1551 = vadd.f32 %v1515, %v1516
        %1552 = vadd.xlane.f32.xlu0 %v1551
        %v1553 = vpop.xlane.xlu0 %1552
        %v1554 = vadd.f32 %v1517, %v1518
        %1555 = vadd.xlane.f32.xlu0 %v1554
        %v1556 = vpop.xlane.xlu0 %1555
        %v1557 = vadd.f32 %v1519, %v1520
        %1558 = vadd.xlane.f32.xlu0 %v1557
        %v1559 = vpop.xlane.xlu0 %1558
        %v1560 = vadd.f32 %v1521, %v1522
        %1561 = vadd.xlane.f32.xlu0 %v1560
        %v1562 = vpop.xlane.xlu0 %1561
        %v1563 = vadd.f32 %v1523, %v1524
        %1564 = vadd.xlane.f32.xlu0 %v1563
        %v1565 = vpop.xlane.xlu0 %1564
        %v1566 = vadd.f32 %v1525, %v1526
        %1567 = vadd.xlane.f32.xlu0 %v1566
        %v1568 = vpop.xlane.xlu0 %1567
        %v1569 = vadd.f32 %v1527, %v1528
        %1570 = vadd.xlane.f32.xlu0 %v1569
        %v1571 = vpop.xlane.xlu0 %1570
        %v1572 = vadd.f32 %v1529, %v1530
        %1573 = vadd.xlane.f32.xlu0 %v1572
        %v1574 = vpop.xlane.xlu0 %1573
        %v1575 = vadd.f32 %v1531, %v1532
        %1576 = vadd.xlane.f32.xlu0 %v1575
        %v1577 = vpop.xlane.xlu0 %1576
        %v1578 = vadd.f32 %v1533, %v1534
        %1579 = vadd.xlane.f32.xlu0 %v1578
        %v1580 = vpop.xlane.xlu0 %1579
        %v1581 = vadd.f32 %v1535, %v1536
        %1582 = vadd.xlane.f32.xlu0 %v1581
        %v1583 = vpop.xlane.xlu0 %1582
        %v1584 = vadd.f32 %v1537, %v1538
        %1585 = vadd.xlane.f32.xlu0 %v1584
        %v1586 = vpop.xlane.xlu0 %1585
        %v1587 = vmul.f32 %v1541, -0.001
        %v1588 = vmul.f32 %v1544, -0.001
        %v1589 = vmul.f32 %v1547, -0.001
        %v1590 = vmul.f32 %v1550, -0.001
        %v1591 = vmul.f32 %v1553, -0.001
        %v1592 = vmul.f32 %v1556, -0.001
        %v1593 = vmul.f32 %v1559, -0.001
        %v1594 = vmul.f32 %v1562, -0.001
        %v1595 = vmul.f32 %v1565, -0.001
        %v1596 = vmul.f32 %v1568, -0.001
        %v1597 = vmul.f32 %v1571, -0.001
        %v1598 = vmul.f32 %v1574, -0.001
        %v1599 = vmul.f32 %v1577, -0.001
        %v1600 = vmul.f32 %v1580, -0.001
        %v1601 = vmul.f32 %v1583, -0.001
        %v1602 = vmul.f32 %v1586, -0.001
        %v1603 = vlaneseq
        %v1604 = vshrl.u32 %v1603, 7
        %v1605 = vadd.s32 %v1604, 8
        %v1606 = vadd.s32 %v1604, 16
        %v1607 = vadd.s32 %v1604, 24
        %v1608 = vadd.s32 %v1604, 32
        %v1609 = vadd.s32 %v1604, 40
        %v1610 = vadd.s32 %v1604, 48
        %v1611 = vadd.s32 %v1604, 56
        %v1612 = vadd.s32 %v1604, 64
        %v1613 = vadd.s32 %v1604, 72
        %v1614 = vadd.s32 %v1604, 80
        %v1615 = vadd.s32 %v1604, 88
        %v1616 = vadd.s32 %v1604, 96
        %v1617 = vadd.s32 %v1604, 104
        %v1618 = vadd.s32 %v1604, 112
        %v1619 = vadd.s32 %v1604, 120
        %s1620 = smul.u32 %s32, 128
        %v1621 = vstv %s1620
        %v1622 = vadd.s32 %v1604, %v1621
        %v1623 = vadd.s32 %v1605, %v1621
        %v1624 = vadd.s32 %v1606, %v1621
        %v1625 = vadd.s32 %v1607, %v1621
        %v1626 = vadd.s32 %v1608, %v1621
        %v1627 = vadd.s32 %v1609, %v1621
        %v1628 = vadd.s32 %v1610, %v1621
        %v1629 = vadd.s32 %v1611, %v1621
        %v1630 = vadd.s32 %v1612, %v1621
        %v1631 = vadd.s32 %v1613, %v1621
        %v1632 = vadd.s32 %v1614, %v1621
        %v1633 = vadd.s32 %v1615, %v1621
        %v1634 = vadd.s32 %v1616, %v1621
        %v1635 = vadd.s32 %v1617, %v1621
        %v1636 = vadd.s32 %v1618, %v1621
        %v1637 = vadd.s32 %v1619, %v1621
        %vm1638 = vcmp.lt.s32.totalorder %v1622, 200
        %vm1639 = vcmp.lt.s32.totalorder %v1623, 200
        %vm1640 = vcmp.lt.s32.totalorder %v1624, 200
        %vm1641 = vcmp.lt.s32.totalorder %v1625, 200
        %vm1642 = vcmp.lt.s32.totalorder %v1626, 200
        %vm1643 = vcmp.lt.s32.totalorder %v1627, 200
        %vm1644 = vcmp.lt.s32.totalorder %v1628, 200
        %vm1645 = vcmp.lt.s32.totalorder %v1629, 200
        %vm1646 = vcmp.lt.s32.totalorder %v1630, 200
        %vm1647 = vcmp.lt.s32.totalorder %v1631, 200
        %vm1648 = vcmp.lt.s32.totalorder %v1632, 200
        %vm1649 = vcmp.lt.s32.totalorder %v1633, 200
        %vm1650 = vcmp.lt.s32.totalorder %v1634, 200
        %vm1651 = vcmp.lt.s32.totalorder %v1635, 200
        %vm1652 = vcmp.lt.s32.totalorder %v1636, 200
        %vm1653 = vcmp.lt.s32.totalorder %v1637, 200
        %v1654 = vsel %vm1638, %v1587, 0.0
        %v1655 = vsel %vm1639, %v1588, 0.0
        %v1656 = vsel %vm1640, %v1589, 0.0
        %v1657 = vsel %vm1641, %v1590, 0.0
        %v1658 = vsel %vm1642, %v1591, 0.0
        %v1659 = vsel %vm1643, %v1592, 0.0
        %v1660 = vsel %vm1644, %v1593, 0.0
        %v1661 = vsel %vm1645, %v1594, 0.0
        %v1662 = vsel %vm1646, %v1595, 0.0
        %v1663 = vsel %vm1647, %v1596, 0.0
        %v1664 = vsel %vm1648, %v1597, 0.0
        %v1665 = vsel %vm1649, %v1598, 0.0
        %v1666 = vsel %vm1650, %v1599, 0.0
        %v1667 = vsel %vm1651, %v1600, 0.0
        %v1668 = vsel %vm1652, %v1601, 0.0
        %v1669 = vsel %vm1653, %v1602, 0.0
        %vm1670 = vcmask 7168
        %v1671 = vsel %vm1670, %v1654, 0.0
        %v1672 = vsel %vm1670, %v1655, 0.0
        %v1673 = vadd.f32 %v1671, %v1672
        %v1674 = vsel %vm1670, %v1656, 0.0
        %v1675 = vadd.f32 %v1673, %v1674
        %v1676 = vsel %vm1670, %v1657, 0.0
        %v1677 = vadd.f32 %v1675, %v1676
        %v1678 = vsel %vm1670, %v1658, 0.0
        %v1679 = vadd.f32 %v1677, %v1678
        %v1680 = vsel %vm1670, %v1659, 0.0
        %v1681 = vadd.f32 %v1679, %v1680
        %v1682 = vsel %vm1670, %v1660, 0.0
        %v1683 = vadd.f32 %v1681, %v1682
        %v1684 = vsel %vm1670, %v1661, 0.0
        %v1685 = vadd.f32 %v1683, %v1684
        %v1686 = vsel %vm1670, %v1662, 0.0
        %v1687 = vadd.f32 %v1685, %v1686
        %v1688 = vsel %vm1670, %v1663, 0.0
        %v1689 = vadd.f32 %v1687, %v1688
        %v1690 = vsel %vm1670, %v1664, 0.0
        %v1691 = vadd.f32 %v1689, %v1690
        %v1692 = vsel %vm1670, %v1665, 0.0
        %v1693 = vadd.f32 %v1691, %v1692
        %v1694 = vsel %vm1670, %v1666, 0.0
        %v1695 = vadd.f32 %v1693, %v1694
        %v1696 = vsel %vm1670, %v1667, 0.0
        %v1697 = vadd.f32 %v1695, %v1696
        %v1698 = vsel %vm1670, %v1668, 0.0
        %v1699 = vadd.f32 %v1697, %v1698
        %v1700 = vsel %vm1670, %v1669, 0.0
        %v1701 = vadd.f32 %v1699, %v1700
        %1702 = vadd.xlane.f32.xlu0 %v1701
        %v1703 = vpop.xlane.xlu0 %1702
        %v1704 = vrot.slane %v1703, 4
        %v1705 = vadd.f32 %v1703, %v1704
        %v1706 = vrot.slane %v1705, 2
        %v1707 = vadd.f32 %v1705, %v1706
        %v1708 = vrot.slane %v1707, 1
        %v1709 = vadd.f32 %v1707, %v1708
        %s1710 = vtos %v1709
        %v1711 = vstv %s1710
        %1712 = vst [vmem:[%s378] sm:$0xff] %v1711
        %s1713 = sand.u32 %s176, 1
        %s1714 = scalar_lea.sflag [#allocation4], %s1713
        %s1715 = sand.u32 %s176, 1
        %s1716 = smul.addr %s1715, 256
        %s1717 = scalar_lea.vmem [#allocation10], %s1716
        %s1718 = sand.u32 %s202, 1
        %s1719 = scalar_lea.sflag [#allocation12], %s1718
        %s1720 = sand.u32 %s202, 1
        %s1721 = smul.addr %s1720, 8
        %s1722 = scalar_lea.vmem [#allocation11], %s1721
        // Predicated region
        $region61: #{tpu_custom_call.1} parent=43 // pred_check
          %p1723 = pneg %p186
        $region62: #{tpu_custom_call.1} parent=43 // pred_check_branch
          %1725 = sbr.rel (%p1723) target = $region64
        $region63: #{tpu_custom_call.1} parent=43 // pred_region
          %s1726 = smul.u32 16, %s32
          %s1728 = ssub.s32 4096, 4096
          %1729 = vsyncadd %s1714, %s1728
          %s1730 = smul.addr %s1726, 2
          %s1731 = smul.addr %s1730, 128
          %s1732 = scalar_lea.hbm %s6, %s1731
          %s1733 = sshll.u32 %s1717, 4
          %s1734 = int_to_ptr.vmem [resolvable:$true] %s1733
          %1739 = dma.vmem_to_hbm [thread:$0]  %s1734, 4096, %s1732, %s1714, 256, 256, 16
        $region64: #{tpu_custom_call.1} parent=43 // pred_fallthru
          _
        // Predicated region
        $region65: #{tpu_custom_call.1} parent=43 // pred_check
          %p1740 = pneg %p212
        $region66: #{tpu_custom_call.1} parent=43 // pred_check_branch
          %1742 = sbr.rel (%p1740) target = $region68
        $region67: #{tpu_custom_call.1} parent=43 // pred_region
          %s1744 = ssub.s32 128, 128
          %1745 = vsyncadd %s1719, %s1744
          %s1746 = smul.addr %s32, 128
          %s1747 = scalar_lea.hbm %s7, %s1746
          %s1749 = sshll.u32 %s1722, 4
          %s1750 = int_to_ptr.vmem [resolvable:$true] %s1749
          %1752 = dma.vmem_to_hbm [thread:$0]  %s1750, 128, %s1747, %s1719
        $region68: #{tpu_custom_call.1} parent=43 // pred_fallthru
          _
      $region44: #{tpu_custom_call.1} parent=5 // pred_fallthru
        _
      %p1753 = scmp.le.s32.totalorder 2, %s27
      // Predicated region
      $region69: #{tpu_custom_call.1} parent=5 // pred_check
        %p1754 = pneg %p1753
      $region70: #{tpu_custom_call.1} parent=5 // pred_check_branch
        %1756 = sbr.rel (%p1754) target = $region72
      $region71: #{tpu_custom_call.1} parent=5 // pred_region
        %s1757 = ssub.s32 %s27, 2
        // Predicated region
        $region73: #{tpu_custom_call.1} parent=71 // pred_check
          %p1758 = pneg %p192
        $region74: #{tpu_custom_call.1} parent=71 // pred_check_branch
          %1760 = sbr.rel (%p1758) target = $region76
        $region75: #{tpu_custom_call.1} parent=71 // pred_region
          %s1761 = sand.u32 %s177, 1
          %s1762 = scalar_lea.sflag [#allocation4], %s1761
          %s1763 = sand.u32 %s177, 1
          %s1764 = smul.addr %s1763, 256
          %s1765 = scalar_lea.vmem [#allocation10], %s1764
          %1766 = dma.done %s1762, 4096
        $region76: #{tpu_custom_call.1} parent=71 // pred_fallthru
          _
        // Predicated region
        $region77: #{tpu_custom_call.1} parent=71 // pred_check
          %p1767 = pneg %p218
        $region78: #{tpu_custom_call.1} parent=71 // pred_check_branch
          %1769 = sbr.rel (%p1767) target = $region80
        $region79: #{tpu_custom_call.1} parent=71 // pred_region
          %s1770 = sand.u32 %s203, 1
          %s1771 = scalar_lea.sflag [#allocation12], %s1770
          %s1772 = sand.u32 %s203, 1
          %s1773 = smul.addr %s1772, 8
          %s1774 = scalar_lea.vmem [#allocation11], %s1773
          %1775 = dma.done %s1771, 128
        $region80: #{tpu_custom_call.1} parent=71 // pred_fallthru
          _
      $region72: #{tpu_custom_call.1} parent=5 // pred_fallthru
        _
    $region6: #{tpu_custom_call.1} parent=1 // loop_footer
      %s31 = sadd.s32 1, %s27
    $region7: #{tpu_custom_call.1} parent=1 // loop_footer_branch
      %26 = sbr.rel target = $region3
    $region8: #{tpu_custom_call.1} parent=1 // loop_exit
      _
    %1776 = vsyncpa [#allocation3], 1
    %s1777 = scalar_lea.sflag [#allocation3], 1
    %1778 = vsyncpa %s1777, 1
    %1779 = vsyncpa [#allocation6], 1
    %s1780 = scalar_lea.sflag [#allocation6], 1
    %1781 = vsyncpa %s1780, 1
    %1782 = vsyncpa [#allocation9], 1
    %1783 = vsyncpa [#allocation4], 1
    %s1784 = scalar_lea.sflag [#allocation4], 1
    %1785 = vsyncpa %s1784, 1
    %1786 = vsyncpa [#allocation12], 1
    %s1787 = scalar_lea.sflag [#allocation12], 1
    %1788 = vsyncpa %s1787, 1

</llo_original>
